<compile_context>
chip_gen: v6e
topology: v6e:2x2x1
jax: 0.10.0
libtpu: 0.0.40
codegen_flags: <defaults>
</compile_context>

<pallas_src>
import math

import jax
import jax.numpy as jnp
import numpy as np
from jax import lax
from jax.experimental import pallas as pl
from jax.experimental.pallas import tpu as pltpu

HIDDEN = 32
NUM_HEADS = 4
ATTN_DIM = 48
HEAD_DIM = ATTN_DIM // NUM_HEADS
SEQ = 8
BATCH = 2
SCALE = math.sqrt(HEAD_DIM)
INV_SCALE = 1.0 / SCALE
LN_EPS = 1e-5


def mhta_kernel(x_ref, slab_ref, woT4_ref, vecs_ref, o_ref):
    # x_ref     : (B*S, H)             = (16, 32)   flattened activations
    # slab_ref  : (H, NH*H + ATTN_DIM) = (32, 176)  [M_0 | M_1 | M_2 | M_3 | Wv^T]
    # woT4_ref  : (NH, HEAD_DIM, H)    = (4, 12, 32) per-head Wo^T
    # vecs_ref  : (3, H)               = (3, 32)    [bo; gamma; beta]
    # o_ref     : (B, H)               = (2, 32)

    x_all = x_ref[...]                                            # (16, 32)

    # One lane-dense MXU push for both batches: scores-precursor + V projection.
    proj = jnp.dot(x_all, slab_ref[...],
                   preferred_element_type=jnp.float32)            # (16, 176)

    vecs = vecs_ref[...]                                          # (3, 32)
    bo = vecs[0:1, :]
    gamma = vecs[1:2, :]
    beta = vecs[2:3, :]

    ys = []
    for b in range(BATCH):                                        # static unroll
        r0 = b * SEQ
        x_b = x_all[r0:r0 + SEQ, :]                               # (8, 32)
        x_bT = x_b.T                                              # (32, 8) one transpose per batch
        xm = proj[r0:r0 + SEQ, 0:NUM_HEADS * HIDDEN]              # (8, 128)  x @ [M_h]
        v = proj[r0:r0 + SEQ, NUM_HEADS * HIDDEN:]                # (8, 48)   V

        acc = None
        for h in range(NUM_HEADS):                                # static unroll
            xm_h = xm[:, h * HIDDEN:(h + 1) * HIDDEN]             # (8, 32)
            # scores_h = x_b (Wq_h^T / sqrt(hd)) Wk_h x_b^T  (scale already folded)
            scores = jnp.dot(xm_h, x_bT,
                             preferred_element_type=jnp.float32)  # (8, 8)
            scores = scores - jnp.max(scores, axis=-1, keepdims=True)
            e = jnp.exp(scores)
            attn = e / jnp.sum(e, axis=-1, keepdims=True)
            # TODO(synk): Dropout(p=0.1) on attention weights is identity at inference; omitted.

            v_h = v[:, h * HEAD_DIM:(h + 1) * HEAD_DIM]           # (8, 12)
            att_h = jnp.dot(attn, v_h,
                            preferred_element_type=jnp.float32)   # (8, 12)
            # Per-head output projection accumulated in f32 (replaces lane concat).
            contrib = jnp.dot(att_h, woT4_ref[h],
                              preferred_element_type=jnp.float32) # (8, 32)
            acc = contrib if acc is None else acc + contrib

        pooled = jnp.mean(acc, axis=0, keepdims=True) + bo        # (1, 32) mean over seq (+ bias once)
        residual = x_b[SEQ - 1:SEQ, :]                            # (1, 32) last timestep
        ys.append(pooled + residual)

    y = jnp.concatenate(ys, axis=0)                               # (2, 32)
    mu = jnp.mean(y, axis=-1, keepdims=True)
    var = jnp.mean((y - mu) ** 2, axis=-1, keepdims=True)
    normed = (y - mu) * lax.rsqrt(var + LN_EPS)
    o_ref[...] = normed * gamma + beta                            # single (2, 32) store


def mhta_forward(x, Wq, Wk, Wv, Wo, bo, gamma, beta):
    B, S, H = x.shape

    # ---- one-time weight prep (outside the hot path) ----------------------
    # Per-head M_h = (Wq_h^T * 1/sqrt(hd)) @ Wk_h  so scores = (x @ M_h) @ x^T.
    m_blocks = []
    for h in range(NUM_HEADS):
        Wq_h = Wq[h * HEAD_DIM:(h + 1) * HEAD_DIM, :]             # (12, 32)
        Wk_h = Wk[h * HEAD_DIM:(h + 1) * HEAD_DIM, :]             # (12, 32)
        m_blocks.append((Wq_h.T * INV_SCALE) @ Wk_h)              # (32, 32)
    m_slab = jnp.concatenate(m_blocks, axis=1)                    # (32, 128) lane-dense
    slab = jnp.concatenate([m_slab, Wv.T], axis=1)                # (32, 176)

    woT4 = Wo.T.reshape(NUM_HEADS, HEAD_DIM, H)                   # (4, 12, 32)
    vecs = jnp.stack([bo, gamma, beta], axis=0)                   # (3, 32)
    x2d = x.reshape(B * S, H)                                     # (16, 32)

    return pl.pallas_call(
        mhta_kernel,
        out_shape=jax.ShapeDtypeStruct((B, H), jnp.float32),
        grid=(1,),
        in_specs=[
            pl.BlockSpec((B * S, H), lambda i: (0, 0)),                       # activations
            pl.BlockSpec((H, NUM_HEADS * H + ATTN_DIM), lambda i: (0, 0)),    # fused M/Wv slab
            pl.BlockSpec((NUM_HEADS, HEAD_DIM, H), lambda i: (0, 0, 0)),      # per-head Wo^T
            pl.BlockSpec((3, H), lambda i: (0, 0)),                           # bo/gamma/beta
        ],
        out_specs=pl.BlockSpec((B, H), lambda i: (0, 0)),
        compiler_params=pltpu.CompilerParams(
            dimension_semantics=("arbitrary",)),
    )(x2d, slab, woT4, vecs)


# ---------------------------------------------------------------------------
# Deterministic parameter init (mirrors _init_weights: xavier_uniform).
# ---------------------------------------------------------------------------
def xavier_uniform(key, shape, gain=1.0):
    fan_out, fan_in = shape  # PyTorch Linear weight is (out_features, in_features)
    limit = gain * math.sqrt(6.0 / (fan_in + fan_out))
    return jax.random.uniform(key, shape, jnp.float32, -limit, limit)


def reference_forward(x, Wq, Wk, Wv, Wo, bo, gamma, beta):
    B, S, H = x.shape
    Q = x @ Wq.T
    K = x @ Wk.T
    V = x @ Wv.T
    Q = Q.reshape(B, S, NUM_HEADS, HEAD_DIM).transpose(0, 2, 1, 3)
    K = K.reshape(B, S, NUM_HEADS, HEAD_DIM).transpose(0, 2, 1, 3)
    V = V.reshape(B, S, NUM_HEADS, HEAD_DIM).transpose(0, 2, 1, 3)
    scores = jnp.einsum("bhqd,bhkd->bhqk", Q, K) / SCALE
    attn = jax.nn.softmax(scores, axis=-1)
    attended = jnp.einsum("bhqk,bhkd->bhqd", attn, V)
    attended = attended.transpose(0, 2, 1, 3).reshape(B, S, ATTN_DIM)
    out = attended @ Wo.T + bo
    pooled = jnp.mean(out, axis=1)
    residual = x[:, -1, :]
    y = pooled + residual
    mu = jnp.mean(y, axis=-1, keepdims=True)
    var = jnp.mean((y - mu) ** 2, axis=-1, keepdims=True)
    return (y - mu) / jnp.sqrt(var + LN_EPS) * gamma + beta


if __name__ == "__main__":
    root = jax.random.PRNGKey(0)
    kx, kq, kk, kv, ko = jax.random.split(root, 5)

    x = jax.random.normal(kx, (BATCH, SEQ, HIDDEN), jnp.float32)

    Wq = xavier_uniform(kq, (ATTN_DIM, HIDDEN), gain=0.6)
    Wk = xavier_uniform(kk, (ATTN_DIM, HIDDEN), gain=0.6)
    Wv = xavier_uniform(kv, (ATTN_DIM, HIDDEN), gain=0.6)
    Wo = xavier_uniform(ko, (HIDDEN, ATTN_DIM), gain=1.0)
    bo = jnp.zeros((HIDDEN,), jnp.float32)
    gamma = jnp.ones((HIDDEN,), jnp.float32)
    beta = jnp.zeros((HIDDEN,), jnp.float32)

    out = mhta_forward(x, Wq, Wk, Wv, Wo, bo, gamma, beta)
    out = jax.block_until_ready(out)

    ref = reference_forward(x, Wq, Wk, Wv, Wo, bo, gamma, beta)
    np.testing.assert_allclose(np.asarray(out), np.asarray(ref), rtol=1e-4, atol=1e-4)

    print("KERNEL_OK")
</pallas_src>

<mosaic_0001>
module attributes {stable_mosaic.version = 11 : i64} {
  func.func @mhta_kernel(%arg0: i32, %arg1: memref<16x32xf32, #tpu.memory_space<vmem>>, %arg2: memref<32x176xf32, #tpu.memory_space<vmem>>, %arg3: memref<4x12x32xf32, #tpu.memory_space<vmem>>, %arg4: memref<3x32xf32, #tpu.memory_space<vmem>>, %arg5: memref<2x32xf32, #tpu.memory_space<vmem>>) attributes {dimension_semantics = [#tpu.dimension_semantics<arbitrary>], iteration_bounds = array<i64: 1>, scalar_prefetch = 0 : i64, scratch_operands = 0 : i64, tpu.core_type = #tpu.core_type<tc>, window_params = [{pipeline_mode = #tpu.pipeline_mode<synchronous>, transform_indices = @transform_0, window_bounds = array<i64: 16, 32>}, {pipeline_mode = #tpu.pipeline_mode<synchronous>, transform_indices = @transform_1, window_bounds = array<i64: 32, 176>}, {pipeline_mode = #tpu.pipeline_mode<synchronous>, transform_indices = @transform_2, window_bounds = array<i64: 4, 12, 32>}, {pipeline_mode = #tpu.pipeline_mode<synchronous>, transform_indices = @transform_3, window_bounds = array<i64: 3, 32>}, {pipeline_mode = #tpu.pipeline_mode<synchronous>, transform_indices = @transform_4, window_bounds = array<i64: 2, 32>}]} {
    %c0 = arith.constant 0 : index
    %c0_0 = arith.constant 0 : index
    %0 = vector.load %arg1[%c0, %c0_0] : memref<16x32xf32, #tpu.memory_space<vmem>>, vector<16x32xf32>
    %c0_1 = arith.constant 0 : index
    %c0_2 = arith.constant 0 : index
    %1 = vector.load %arg2[%c0_1, %c0_2] : memref<32x176xf32, #tpu.memory_space<vmem>>, vector<32x176xf32>
    %cst = arith.constant dense<0.000000e+00> : vector<16x176xf32>
    %2 = tpu.matmul %0, %1, %cst {dimension_numbers = #tpu.dot_dimension_numbers<[1], [0], [0], [1], [0, 0, 1, 1], [], []>} : vector<16x32xf32>, vector<32x176xf32>, vector<16x176xf32> -> vector<16x176xf32>
    %c0_3 = arith.constant 0 : index
    %c0_4 = arith.constant 0 : index
    %3 = vector.load %arg4[%c0_3, %c0_4] : memref<3x32xf32, #tpu.memory_space<vmem>>, vector<3x32xf32>
    %4 = vector.extract_strided_slice %3 {offsets = [0, 0], sizes = [1, 32], strides = [1, 1]} : vector<3x32xf32> to vector<1x32xf32>
    %5 = vector.extract_strided_slice %3 {offsets = [1, 0], sizes = [1, 32], strides = [1, 1]} : vector<3x32xf32> to vector<1x32xf32>
    %6 = vector.extract_strided_slice %3 {offsets = [2, 0], sizes = [1, 32], strides = [1, 1]} : vector<3x32xf32> to vector<1x32xf32>
    %7 = vector.extract_strided_slice %0 {offsets = [0, 0], sizes = [8, 32], strides = [1, 1]} : vector<16x32xf32> to vector<8x32xf32>
    %8 = tpu.transpose %7, [1, 0] : vector<8x32xf32> -> vector<32x8xf32>
    %9 = vector.extract_strided_slice %2 {offsets = [0, 0], sizes = [8, 128], strides = [1, 1]} : vector<16x176xf32> to vector<8x128xf32>
    %10 = vector.extract_strided_slice %2 {offsets = [0, 128], sizes = [8, 48], strides = [1, 1]} : vector<16x176xf32> to vector<8x48xf32>
    %11 = vector.extract_strided_slice %9 {offsets = [0, 0], sizes = [8, 32], strides = [1, 1]} : vector<8x128xf32> to vector<8x32xf32>
    %cst_5 = arith.constant dense<0.000000e+00> : vector<8x8xf32>
    %12 = tpu.matmul %11, %8, %cst_5 {dimension_numbers = #tpu.dot_dimension_numbers<[1], [0], [0], [1], [0, 0, 1, 1], [], []>} : vector<8x32xf32>, vector<32x8xf32>, vector<8x8xf32> -> vector<8x8xf32>
    %cst_6 = arith.constant dense<0xFF800000> : vector<8xf32>
    %13 = vector.multi_reduction <maximumf>, %12, %cst_6 [1] : vector<8x8xf32> to vector<8xf32>
    %14 = vector.shape_cast %13 : vector<8xf32> to vector<8x1xf32>
    %15 = vector.broadcast %14 : vector<8x1xf32> to vector<8x8xf32>
    %16 = arith.subf %12, %15 : vector<8x8xf32>
    %17 = math.exp %16 : vector<8x8xf32>
    %cst_7 = arith.constant dense<0.000000e+00> : vector<8xf32>
    %18 = vector.multi_reduction <add>, %17, %cst_7 [1] : vector<8x8xf32> to vector<8xf32>
    %19 = vector.shape_cast %18 : vector<8xf32> to vector<8x1xf32>
    %20 = vector.broadcast %19 : vector<8x1xf32> to vector<8x8xf32>
    %21 = arith.divf %17, %20 : vector<8x8xf32>
    %22 = vector.extract_strided_slice %10 {offsets = [0, 0], sizes = [8, 12], strides = [1, 1]} : vector<8x48xf32> to vector<8x12xf32>
    %cst_8 = arith.constant dense<0.000000e+00> : vector<8x12xf32>
    %23 = tpu.matmul %21, %22, %cst_8 {dimension_numbers = #tpu.dot_dimension_numbers<[1], [0], [0], [1], [0, 0, 1, 1], [], []>} : vector<8x8xf32>, vector<8x12xf32>, vector<8x12xf32> -> vector<8x12xf32>
    %c0_9 = arith.constant 0 : index
    %c0_10 = arith.constant 0 : index
    %c0_11 = arith.constant 0 : index
    %24 = vector.load %arg3[%c0_9, %c0_10, %c0_11] : memref<4x12x32xf32, #tpu.memory_space<vmem>>, vector<1x12x32xf32>
    %25 = vector.shape_cast %24 : vector<1x12x32xf32> to vector<12x32xf32>
    %cst_12 = arith.constant dense<0.000000e+00> : vector<8x32xf32>
    %26 = tpu.matmul %23, %25, %cst_12 {dimension_numbers = #tpu.dot_dimension_numbers<[1], [0], [0], [1], [0, 0, 1, 1], [], []>} : vector<8x12xf32>, vector<12x32xf32>, vector<8x32xf32> -> vector<8x32xf32>
    %27 = vector.extract_strided_slice %9 {offsets = [0, 32], sizes = [8, 32], strides = [1, 1]} : vector<8x128xf32> to vector<8x32xf32>
    %cst_13 = arith.constant dense<0.000000e+00> : vector<8x8xf32>
    %28 = tpu.matmul %27, %8, %cst_13 {dimension_numbers = #tpu.dot_dimension_numbers<[1], [0], [0], [1], [0, 0, 1, 1], [], []>} : vector<8x32xf32>, vector<32x8xf32>, vector<8x8xf32> -> vector<8x8xf32>
    %cst_14 = arith.constant dense<0xFF800000> : vector<8xf32>
    %29 = vector.multi_reduction <maximumf>, %28, %cst_14 [1] : vector<8x8xf32> to vector<8xf32>
    %30 = vector.shape_cast %29 : vector<8xf32> to vector<8x1xf32>
    %31 = vector.broadcast %30 : vector<8x1xf32> to vector<8x8xf32>
    %32 = arith.subf %28, %31 : vector<8x8xf32>
    %33 = math.exp %32 : vector<8x8xf32>
    %cst_15 = arith.constant dense<0.000000e+00> : vector<8xf32>
    %34 = vector.multi_reduction <add>, %33, %cst_15 [1] : vector<8x8xf32> to vector<8xf32>
    %35 = vector.shape_cast %34 : vector<8xf32> to vector<8x1xf32>
    %36 = vector.broadcast %35 : vector<8x1xf32> to vector<8x8xf32>
    %37 = arith.divf %33, %36 : vector<8x8xf32>
    %38 = vector.extract_strided_slice %10 {offsets = [0, 12], sizes = [8, 12], strides = [1, 1]} : vector<8x48xf32> to vector<8x12xf32>
    %cst_16 = arith.constant dense<0.000000e+00> : vector<8x12xf32>
    %39 = tpu.matmul %37, %38, %cst_16 {dimension_numbers = #tpu.dot_dimension_numbers<[1], [0], [0], [1], [0, 0, 1, 1], [], []>} : vector<8x8xf32>, vector<8x12xf32>, vector<8x12xf32> -> vector<8x12xf32>
    %c1 = arith.constant 1 : index
    %c0_17 = arith.constant 0 : index
    %c0_18 = arith.constant 0 : index
    %40 = vector.load %arg3[%c1, %c0_17, %c0_18] : memref<4x12x32xf32, #tpu.memory_space<vmem>>, vector<1x12x32xf32>
    %41 = vector.shape_cast %40 : vector<1x12x32xf32> to vector<12x32xf32>
    %cst_19 = arith.constant dense<0.000000e+00> : vector<8x32xf32>
    %42 = tpu.matmul %39, %41, %cst_19 {dimension_numbers = #tpu.dot_dimension_numbers<[1], [0], [0], [1], [0, 0, 1, 1], [], []>} : vector<8x12xf32>, vector<12x32xf32>, vector<8x32xf32> -> vector<8x32xf32>
    %43 = arith.addf %26, %42 : vector<8x32xf32>
    %44 = vector.extract_strided_slice %9 {offsets = [0, 64], sizes = [8, 32], strides = [1, 1]} : vector<8x128xf32> to vector<8x32xf32>
    %cst_20 = arith.constant dense<0.000000e+00> : vector<8x8xf32>
    %45 = tpu.matmul %44, %8, %cst_20 {dimension_numbers = #tpu.dot_dimension_numbers<[1], [0], [0], [1], [0, 0, 1, 1], [], []>} : vector<8x32xf32>, vector<32x8xf32>, vector<8x8xf32> -> vector<8x8xf32>
    %cst_21 = arith.constant dense<0xFF800000> : vector<8xf32>
    %46 = vector.multi_reduction <maximumf>, %45, %cst_21 [1] : vector<8x8xf32> to vector<8xf32>
    %47 = vector.shape_cast %46 : vector<8xf32> to vector<8x1xf32>
    %48 = vector.broadcast %47 : vector<8x1xf32> to vector<8x8xf32>
    %49 = arith.subf %45, %48 : vector<8x8xf32>
    %50 = math.exp %49 : vector<8x8xf32>
    %cst_22 = arith.constant dense<0.000000e+00> : vector<8xf32>
    %51 = vector.multi_reduction <add>, %50, %cst_22 [1] : vector<8x8xf32> to vector<8xf32>
    %52 = vector.shape_cast %51 : vector<8xf32> to vector<8x1xf32>
    %53 = vector.broadcast %52 : vector<8x1xf32> to vector<8x8xf32>
    %54 = arith.divf %50, %53 : vector<8x8xf32>
    %55 = vector.extract_strided_slice %10 {offsets = [0, 24], sizes = [8, 12], strides = [1, 1]} : vector<8x48xf32> to vector<8x12xf32>
    %cst_23 = arith.constant dense<0.000000e+00> : vector<8x12xf32>
    %56 = tpu.matmul %54, %55, %cst_23 {dimension_numbers = #tpu.dot_dimension_numbers<[1], [0], [0], [1], [0, 0, 1, 1], [], []>} : vector<8x8xf32>, vector<8x12xf32>, vector<8x12xf32> -> vector<8x12xf32>
    %c2 = arith.constant 2 : index
    %c0_24 = arith.constant 0 : index
    %c0_25 = arith.constant 0 : index
    %57 = vector.load %arg3[%c2, %c0_24, %c0_25] : memref<4x12x32xf32, #tpu.memory_space<vmem>>, vector<1x12x32xf32>
    %58 = vector.shape_cast %57 : vector<1x12x32xf32> to vector<12x32xf32>
    %cst_26 = arith.constant dense<0.000000e+00> : vector<8x32xf32>
    %59 = tpu.matmul %56, %58, %cst_26 {dimension_numbers = #tpu.dot_dimension_numbers<[1], [0], [0], [1], [0, 0, 1, 1], [], []>} : vector<8x12xf32>, vector<12x32xf32>, vector<8x32xf32> -> vector<8x32xf32>
    %60 = arith.addf %43, %59 : vector<8x32xf32>
    %61 = vector.extract_strided_slice %9 {offsets = [0, 96], sizes = [8, 32], strides = [1, 1]} : vector<8x128xf32> to vector<8x32xf32>
    %cst_27 = arith.constant dense<0.000000e+00> : vector<8x8xf32>
    %62 = tpu.matmul %61, %8, %cst_27 {dimension_numbers = #tpu.dot_dimension_numbers<[1], [0], [0], [1], [0, 0, 1, 1], [], []>} : vector<8x32xf32>, vector<32x8xf32>, vector<8x8xf32> -> vector<8x8xf32>
    %cst_28 = arith.constant dense<0xFF800000> : vector<8xf32>
    %63 = vector.multi_reduction <maximumf>, %62, %cst_28 [1] : vector<8x8xf32> to vector<8xf32>
    %64 = vector.shape_cast %63 : vector<8xf32> to vector<8x1xf32>
    %65 = vector.broadcast %64 : vector<8x1xf32> to vector<8x8xf32>
    %66 = arith.subf %62, %65 : vector<8x8xf32>
    %67 = math.exp %66 : vector<8x8xf32>
    %cst_29 = arith.constant dense<0.000000e+00> : vector<8xf32>
    %68 = vector.multi_reduction <add>, %67, %cst_29 [1] : vector<8x8xf32> to vector<8xf32>
    %69 = vector.shape_cast %68 : vector<8xf32> to vector<8x1xf32>
    %70 = vector.broadcast %69 : vector<8x1xf32> to vector<8x8xf32>
    %71 = arith.divf %67, %70 : vector<8x8xf32>
    %72 = vector.extract_strided_slice %10 {offsets = [0, 36], sizes = [8, 12], strides = [1, 1]} : vector<8x48xf32> to vector<8x12xf32>
    %cst_30 = arith.constant dense<0.000000e+00> : vector<8x12xf32>
    %73 = tpu.matmul %71, %72, %cst_30 {dimension_numbers = #tpu.dot_dimension_numbers<[1], [0], [0], [1], [0, 0, 1, 1], [], []>} : vector<8x8xf32>, vector<8x12xf32>, vector<8x12xf32> -> vector<8x12xf32>
    %c3 = arith.constant 3 : index
    %c0_31 = arith.constant 0 : index
    %c0_32 = arith.constant 0 : index
    %74 = vector.load %arg3[%c3, %c0_31, %c0_32] : memref<4x12x32xf32, #tpu.memory_space<vmem>>, vector<1x12x32xf32>
    %75 = vector.shape_cast %74 : vector<1x12x32xf32> to vector<12x32xf32>
    %cst_33 = arith.constant dense<0.000000e+00> : vector<8x32xf32>
    %76 = tpu.matmul %73, %75, %cst_33 {dimension_numbers = #tpu.dot_dimension_numbers<[1], [0], [0], [1], [0, 0, 1, 1], [], []>} : vector<8x12xf32>, vector<12x32xf32>, vector<8x32xf32> -> vector<8x32xf32>
    %77 = arith.addf %60, %76 : vector<8x32xf32>
    %cst_34 = arith.constant dense<0.000000e+00> : vector<32xf32>
    %78 = vector.multi_reduction <add>, %77, %cst_34 [0] : vector<8x32xf32> to vector<32xf32>
    %79 = vector.shape_cast %78 : vector<32xf32> to vector<1x32xf32>
    %cst_35 = arith.constant 8.000000e+00 : f32
    %80 = vector.broadcast %cst_35 : f32 to vector<1x32xf32>
    %81 = arith.divf %79, %80 : vector<1x32xf32>
    %82 = arith.addf %81, %4 : vector<1x32xf32>
    %83 = vector.extract_strided_slice %7 {offsets = [7, 0], sizes = [1, 32], strides = [1, 1]} : vector<8x32xf32> to vector<1x32xf32>
    %84 = arith.addf %82, %83 : vector<1x32xf32>
    %85 = vector.extract_strided_slice %0 {offsets = [8, 0], sizes = [8, 32], strides = [1, 1]} : vector<16x32xf32> to vector<8x32xf32>
    %86 = tpu.transpose %85, [1, 0] : vector<8x32xf32> -> vector<32x8xf32>
    %87 = vector.extract_strided_slice %2 {offsets = [8, 0], sizes = [8, 128], strides = [1, 1]} : vector<16x176xf32> to vector<8x128xf32>
    %88 = vector.extract_strided_slice %2 {offsets = [8, 128], sizes = [8, 48], strides = [1, 1]} : vector<16x176xf32> to vector<8x48xf32>
    %89 = vector.extract_strided_slice %87 {offsets = [0, 0], sizes = [8, 32], strides = [1, 1]} : vector<8x128xf32> to vector<8x32xf32>
    %cst_36 = arith.constant dense<0.000000e+00> : vector<8x8xf32>
    %90 = tpu.matmul %89, %86, %cst_36 {dimension_numbers = #tpu.dot_dimension_numbers<[1], [0], [0], [1], [0, 0, 1, 1], [], []>} : vector<8x32xf32>, vector<32x8xf32>, vector<8x8xf32> -> vector<8x8xf32>
    %cst_37 = arith.constant dense<0xFF800000> : vector<8xf32>
    %91 = vector.multi_reduction <maximumf>, %90, %cst_37 [1] : vector<8x8xf32> to vector<8xf32>
    %92 = vector.shape_cast %91 : vector<8xf32> to vector<8x1xf32>
    %93 = vector.broadcast %92 : vector<8x1xf32> to vector<8x8xf32>
    %94 = arith.subf %90, %93 : vector<8x8xf32>
    %95 = math.exp %94 : vector<8x8xf32>
    %cst_38 = arith.constant dense<0.000000e+00> : vector<8xf32>
    %96 = vector.multi_reduction <add>, %95, %cst_38 [1] : vector<8x8xf32> to vector<8xf32>
    %97 = vector.shape_cast %96 : vector<8xf32> to vector<8x1xf32>
    %98 = vector.broadcast %97 : vector<8x1xf32> to vector<8x8xf32>
    %99 = arith.divf %95, %98 : vector<8x8xf32>
    %100 = vector.extract_strided_slice %88 {offsets = [0, 0], sizes = [8, 12], strides = [1, 1]} : vector<8x48xf32> to vector<8x12xf32>
    %cst_39 = arith.constant dense<0.000000e+00> : vector<8x12xf32>
    %101 = tpu.matmul %99, %100, %cst_39 {dimension_numbers = #tpu.dot_dimension_numbers<[1], [0], [0], [1], [0, 0, 1, 1], [], []>} : vector<8x8xf32>, vector<8x12xf32>, vector<8x12xf32> -> vector<8x12xf32>
    %c0_40 = arith.constant 0 : index
    %c0_41 = arith.constant 0 : index
    %c0_42 = arith.constant 0 : index
    %102 = vector.load %arg3[%c0_40, %c0_41, %c0_42] : memref<4x12x32xf32, #tpu.memory_space<vmem>>, vector<1x12x32xf32>
    %103 = vector.shape_cast %102 : vector<1x12x32xf32> to vector<12x32xf32>
    %cst_43 = arith.constant dense<0.000000e+00> : vector<8x32xf32>
    %104 = tpu.matmul %101, %103, %cst_43 {dimension_numbers = #tpu.dot_dimension_numbers<[1], [0], [0], [1], [0, 0, 1, 1], [], []>} : vector<8x12xf32>, vector<12x32xf32>, vector<8x32xf32> -> vector<8x32xf32>
    %105 = vector.extract_strided_slice %87 {offsets = [0, 32], sizes = [8, 32], strides = [1, 1]} : vector<8x128xf32> to vector<8x32xf32>
    %cst_44 = arith.constant dense<0.000000e+00> : vector<8x8xf32>
    %106 = tpu.matmul %105, %86, %cst_44 {dimension_numbers = #tpu.dot_dimension_numbers<[1], [0], [0], [1], [0, 0, 1, 1], [], []>} : vector<8x32xf32>, vector<32x8xf32>, vector<8x8xf32> -> vector<8x8xf32>
    %cst_45 = arith.constant dense<0xFF800000> : vector<8xf32>
    %107 = vector.multi_reduction <maximumf>, %106, %cst_45 [1] : vector<8x8xf32> to vector<8xf32>
    %108 = vector.shape_cast %107 : vector<8xf32> to vector<8x1xf32>
    %109 = vector.broadcast %108 : vector<8x1xf32> to vector<8x8xf32>
    %110 = arith.subf %106, %109 : vector<8x8xf32>
    %111 = math.exp %110 : vector<8x8xf32>
    %cst_46 = arith.constant dense<0.000000e+00> : vector<8xf32>
    %112 = vector.multi_reduction <add>, %111, %cst_46 [1] : vector<8x8xf32> to vector<8xf32>
    %113 = vector.shape_cast %112 : vector<8xf32> to vector<8x1xf32>
    %114 = vector.broadcast %113 : vector<8x1xf32> to vector<8x8xf32>
    %115 = arith.divf %111, %114 : vector<8x8xf32>
    %116 = vector.extract_strided_slice %88 {offsets = [0, 12], sizes = [8, 12], strides = [1, 1]} : vector<8x48xf32> to vector<8x12xf32>
    %cst_47 = arith.constant dense<0.000000e+00> : vector<8x12xf32>
    %117 = tpu.matmul %115, %116, %cst_47 {dimension_numbers = #tpu.dot_dimension_numbers<[1], [0], [0], [1], [0, 0, 1, 1], [], []>} : vector<8x8xf32>, vector<8x12xf32>, vector<8x12xf32> -> vector<8x12xf32>
    %c1_48 = arith.constant 1 : index
    %c0_49 = arith.constant 0 : index
    %c0_50 = arith.constant 0 : index
    %118 = vector.load %arg3[%c1_48, %c0_49, %c0_50] : memref<4x12x32xf32, #tpu.memory_space<vmem>>, vector<1x12x32xf32>
    %119 = vector.shape_cast %118 : vector<1x12x32xf32> to vector<12x32xf32>
    %cst_51 = arith.constant dense<0.000000e+00> : vector<8x32xf32>
    %120 = tpu.matmul %117, %119, %cst_51 {dimension_numbers = #tpu.dot_dimension_numbers<[1], [0], [0], [1], [0, 0, 1, 1], [], []>} : vector<8x12xf32>, vector<12x32xf32>, vector<8x32xf32> -> vector<8x32xf32>
    %121 = arith.addf %104, %120 : vector<8x32xf32>
    %122 = vector.extract_strided_slice %87 {offsets = [0, 64], sizes = [8, 32], strides = [1, 1]} : vector<8x128xf32> to vector<8x32xf32>
    %cst_52 = arith.constant dense<0.000000e+00> : vector<8x8xf32>
    %123 = tpu.matmul %122, %86, %cst_52 {dimension_numbers = #tpu.dot_dimension_numbers<[1], [0], [0], [1], [0, 0, 1, 1], [], []>} : vector<8x32xf32>, vector<32x8xf32>, vector<8x8xf32> -> vector<8x8xf32>
    %cst_53 = arith.constant dense<0xFF800000> : vector<8xf32>
    %124 = vector.multi_reduction <maximumf>, %123, %cst_53 [1] : vector<8x8xf32> to vector<8xf32>
    %125 = vector.shape_cast %124 : vector<8xf32> to vector<8x1xf32>
    %126 = vector.broadcast %125 : vector<8x1xf32> to vector<8x8xf32>
    %127 = arith.subf %123, %126 : vector<8x8xf32>
    %128 = math.exp %127 : vector<8x8xf32>
    %cst_54 = arith.constant dense<0.000000e+00> : vector<8xf32>
    %129 = vector.multi_reduction <add>, %128, %cst_54 [1] : vector<8x8xf32> to vector<8xf32>
    %130 = vector.shape_cast %129 : vector<8xf32> to vector<8x1xf32>
    %131 = vector.broadcast %130 : vector<8x1xf32> to vector<8x8xf32>
    %132 = arith.divf %128, %131 : vector<8x8xf32>
    %133 = vector.extract_strided_slice %88 {offsets = [0, 24], sizes = [8, 12], strides = [1, 1]} : vector<8x48xf32> to vector<8x12xf32>
    %cst_55 = arith.constant dense<0.000000e+00> : vector<8x12xf32>
    %134 = tpu.matmul %132, %133, %cst_55 {dimension_numbers = #tpu.dot_dimension_numbers<[1], [0], [0], [1], [0, 0, 1, 1], [], []>} : vector<8x8xf32>, vector<8x12xf32>, vector<8x12xf32> -> vector<8x12xf32>
    %c2_56 = arith.constant 2 : index
    %c0_57 = arith.constant 0 : index
    %c0_58 = arith.constant 0 : index
    %135 = vector.load %arg3[%c2_56, %c0_57, %c0_58] : memref<4x12x32xf32, #tpu.memory_space<vmem>>, vector<1x12x32xf32>
    %136 = vector.shape_cast %135 : vector<1x12x32xf32> to vector<12x32xf32>
    %cst_59 = arith.constant dense<0.000000e+00> : vector<8x32xf32>
    %137 = tpu.matmul %134, %136, %cst_59 {dimension_numbers = #tpu.dot_dimension_numbers<[1], [0], [0], [1], [0, 0, 1, 1], [], []>} : vector<8x12xf32>, vector<12x32xf32>, vector<8x32xf32> -> vector<8x32xf32>
    %138 = arith.addf %121, %137 : vector<8x32xf32>
    %139 = vector.extract_strided_slice %87 {offsets = [0, 96], sizes = [8, 32], strides = [1, 1]} : vector<8x128xf32> to vector<8x32xf32>
    %cst_60 = arith.constant dense<0.000000e+00> : vector<8x8xf32>
    %140 = tpu.matmul %139, %86, %cst_60 {dimension_numbers = #tpu.dot_dimension_numbers<[1], [0], [0], [1], [0, 0, 1, 1], [], []>} : vector<8x32xf32>, vector<32x8xf32>, vector<8x8xf32> -> vector<8x8xf32>
    %cst_61 = arith.constant dense<0xFF800000> : vector<8xf32>
    %141 = vector.multi_reduction <maximumf>, %140, %cst_61 [1] : vector<8x8xf32> to vector<8xf32>
    %142 = vector.shape_cast %141 : vector<8xf32> to vector<8x1xf32>
    %143 = vector.broadcast %142 : vector<8x1xf32> to vector<8x8xf32>
    %144 = arith.subf %140, %143 : vector<8x8xf32>
    %145 = math.exp %144 : vector<8x8xf32>
    %cst_62 = arith.constant dense<0.000000e+00> : vector<8xf32>
    %146 = vector.multi_reduction <add>, %145, %cst_62 [1] : vector<8x8xf32> to vector<8xf32>
    %147 = vector.shape_cast %146 : vector<8xf32> to vector<8x1xf32>
    %148 = vector.broadcast %147 : vector<8x1xf32> to vector<8x8xf32>
    %149 = arith.divf %145, %148 : vector<8x8xf32>
    %150 = vector.extract_strided_slice %88 {offsets = [0, 36], sizes = [8, 12], strides = [1, 1]} : vector<8x48xf32> to vector<8x12xf32>
    %cst_63 = arith.constant dense<0.000000e+00> : vector<8x12xf32>
    %151 = tpu.matmul %149, %150, %cst_63 {dimension_numbers = #tpu.dot_dimension_numbers<[1], [0], [0], [1], [0, 0, 1, 1], [], []>} : vector<8x8xf32>, vector<8x12xf32>, vector<8x12xf32> -> vector<8x12xf32>
    %c3_64 = arith.constant 3 : index
    %c0_65 = arith.constant 0 : index
    %c0_66 = arith.constant 0 : index
    %152 = vector.load %arg3[%c3_64, %c0_65, %c0_66] : memref<4x12x32xf32, #tpu.memory_space<vmem>>, vector<1x12x32xf32>
    %153 = vector.shape_cast %152 : vector<1x12x32xf32> to vector<12x32xf32>
    %cst_67 = arith.constant dense<0.000000e+00> : vector<8x32xf32>
    %154 = tpu.matmul %151, %153, %cst_67 {dimension_numbers = #tpu.dot_dimension_numbers<[1], [0], [0], [1], [0, 0, 1, 1], [], []>} : vector<8x12xf32>, vector<12x32xf32>, vector<8x32xf32> -> vector<8x32xf32>
    %155 = arith.addf %138, %154 : vector<8x32xf32>
    %cst_68 = arith.constant dense<0.000000e+00> : vector<32xf32>
    %156 = vector.multi_reduction <add>, %155, %cst_68 [0] : vector<8x32xf32> to vector<32xf32>
    %157 = vector.shape_cast %156 : vector<32xf32> to vector<1x32xf32>
    %cst_69 = arith.constant 8.000000e+00 : f32
    %158 = vector.broadcast %cst_69 : f32 to vector<1x32xf32>
    %159 = arith.divf %157, %158 : vector<1x32xf32>
    %160 = arith.addf %159, %4 : vector<1x32xf32>
    %161 = vector.extract_strided_slice %85 {offsets = [7, 0], sizes = [1, 32], strides = [1, 1]} : vector<8x32xf32> to vector<1x32xf32>
    %162 = arith.addf %160, %161 : vector<1x32xf32>
    %163 = tpu.concatenate %84, %162 in 0 : vector<1x32xf32>, vector<1x32xf32> -> vector<2x32xf32>
    %cst_70 = arith.constant dense<0.000000e+00> : vector<2xf32>
    %164 = vector.multi_reduction <add>, %163, %cst_70 [1] : vector<2x32xf32> to vector<2xf32>
    %165 = vector.shape_cast %164 : vector<2xf32> to vector<2x1xf32>
    %cst_71 = arith.constant 3.200000e+01 : f32
    %166 = vector.broadcast %cst_71 : f32 to vector<2x1xf32>
    %167 = arith.divf %165, %166 : vector<2x1xf32>
    %168 = vector.broadcast %167 : vector<2x1xf32> to vector<2x32xf32>
    %169 = arith.subf %163, %168 : vector<2x32xf32>
    %170 = arith.mulf %169, %169 : vector<2x32xf32>
    %cst_72 = arith.constant dense<0.000000e+00> : vector<2xf32>
    %171 = vector.multi_reduction <add>, %170, %cst_72 [1] : vector<2x32xf32> to vector<2xf32>
    %172 = vector.shape_cast %171 : vector<2xf32> to vector<2x1xf32>
    %cst_73 = arith.constant 3.200000e+01 : f32
    %173 = vector.broadcast %cst_73 : f32 to vector<2x1xf32>
    %174 = arith.divf %172, %173 : vector<2x1xf32>
    %175 = vector.broadcast %167 : vector<2x1xf32> to vector<2x32xf32>
    %176 = arith.subf %163, %175 : vector<2x32xf32>
    %cst_74 = arith.constant 9.99999974E-6 : f32
    %177 = vector.broadcast %cst_74 : f32 to vector<2x1xf32>
    %178 = arith.addf %174, %177 : vector<2x1xf32>
    %179 = math.rsqrt %178 : vector<2x1xf32>
    %180 = vector.broadcast %179 : vector<2x1xf32> to vector<2x32xf32>
    %181 = arith.mulf %176, %180 : vector<2x32xf32>
    %182 = vector.broadcast %5 : vector<1x32xf32> to vector<2x32xf32>
    %183 = arith.mulf %181, %182 : vector<2x32xf32>
    %184 = vector.broadcast %6 : vector<1x32xf32> to vector<2x32xf32>
    %185 = arith.addf %183, %184 : vector<2x32xf32>
    %c0_75 = arith.constant 0 : index
    %c0_76 = arith.constant 0 : index
    %186 = vector.load %arg5[%c0_75, %c0_76] : memref<2x32xf32, #tpu.memory_space<vmem>>, vector<2x32xf32>
    tpu.vector_store %arg5[%c0_75, %c0_76], %185 {strides = array<i32>} : memref<2x32xf32, #tpu.memory_space<vmem>>, vector<2x32xf32>,
    return
  }
  func.func @transform_0(%arg0: i32) -> (i32, i32) {
    %c0_i32 = arith.constant 0 : i32
    %c0_i32_0 = arith.constant 0 : i32
    %c0_i32_1 = arith.constant 0 : i32
    return %c0_i32, %c0_i32_0 : i32, i32
  }
  func.func @transform_1(%arg0: i32) -> (i32, i32) {
    %c0_i32 = arith.constant 0 : i32
    %c0_i32_0 = arith.constant 0 : i32
    %c0_i32_1 = arith.constant 0 : i32
    return %c0_i32, %c0_i32_0 : i32, i32
  }
  func.func @transform_2(%arg0: i32) -> (i32, i32, i32) {
    %c0_i32 = arith.constant 0 : i32
    %c0_i32_0 = arith.constant 0 : i32
    %c0_i32_1 = arith.constant 0 : i32
    %c0_i32_2 = arith.constant 0 : i32
    return %c0_i32, %c0_i32_0, %c0_i32_1 : i32, i32, i32
  }
  func.func @transform_3(%arg0: i32) -> (i32, i32) {
    %c0_i32 = arith.constant 0 : i32
    %c0_i32_0 = arith.constant 0 : i32
    %c0_i32_1 = arith.constant 0 : i32
    return %c0_i32, %c0_i32_0 : i32, i32
  }
  func.func @transform_4(%arg0: i32) -> (i32, i32) {
    %c0_i32 = arith.constant 0 : i32
    %c0_i32_0 = arith.constant 0 : i32
    %c0_i32_1 = arith.constant 0 : i32
    return %c0_i32, %c0_i32_0 : i32, i32
  }
}

</mosaic_0001>

<llo_original>
// kernel: tpu_custom_call.1
$region0: #{tpu_custom_call.1}
  #allocation0 [shape = 'u32[]', space=smem, size = 0x4, offset = 0x4, fixed_abs, tag = 'smem constant byte address 0x4 - core index']
  #allocation1 [shape = 'u32[144,128]{1,0:T(1,128)}', space=vmem, size = 0x12000, scoped, tag = 'internal scratch']
  %s0 = inlined_call_operand.vmem [shape: f32[16,32], index: 0, kind: input, shape index: {}]
  %s1 = inlined_call_operand.vmem [shape: f32[32,176], index: 1, kind: input, shape index: {}]
  %s2 = inlined_call_operand.vmem [shape: f32[4,12,32], index: 2, kind: input, shape index: {}]
  %s3 = inlined_call_operand.vmem [shape: f32[3,32], index: 3, kind: input, shape index: {}]
  %s4 = inlined_call_operand.hbm [shape: f32[2,32], index: 4, kind: output, shape index: {}]
  %s5 = sld [smem:[#allocation0]]
  $region26: #{tpu_custom_call.1} parent=0
    _
  %s7 = ssub.s32 1, %s5
  %s8 = scalar_select 0, %s7, %s5
  $region1: #{tpu_custom_call.1} parent=0
    #allocation2 [shape = 'u8[1024]{0}', space=vmem, size = 0x400, scoped, tag = 'output window, operand 0, single buffered']
    #allocation3 [shape = 's32[1]{0}', space=sflag, size = 0x4, scoped, tag = 'scoped memory for tpu_custom_call.1']
    %9 = vsyncpa [#allocation3], 0
    // Predicated region
    $region2: #{tpu_custom_call.1} parent=1 // pred_check
      _
    $region3: #{tpu_custom_call.1} parent=1 // pred_check_branch
      %11 = sbr.rel (0) target = $region5
    $region4: #{tpu_custom_call.1} parent=1 // pred_region
      _
    $region5: #{tpu_custom_call.1} parent=1 // pred_fallthru
      _
    // Predicated region
    $region6: #{tpu_custom_call.1} parent=1 // pred_check
      _
    $region7: #{tpu_custom_call.1} parent=1 // pred_check_branch
      %13 = sbr.rel (0) target = $region9
    $region8: #{tpu_custom_call.1} parent=1 // pred_region
      _
    $region9: #{tpu_custom_call.1} parent=1 // pred_fallthru
      _
    // Predicated region
    $region10: #{tpu_custom_call.1} parent=1 // pred_check
      _
    $region11: #{tpu_custom_call.1} parent=1 // pred_check_branch
      %15 = sbr.rel (0) target = $region13
    $region12: #{tpu_custom_call.1} parent=1 // pred_region
      _
    $region13: #{tpu_custom_call.1} parent=1 // pred_fallthru
      _
    // Predicated region
    $region14: #{tpu_custom_call.1} parent=1 // pred_check
      _
    $region15: #{tpu_custom_call.1} parent=1 // pred_check_branch
      %17 = sbr.rel (0) target = $region17
    $region16: #{tpu_custom_call.1} parent=1 // pred_region
      _
    $region17: #{tpu_custom_call.1} parent=1 // pred_fallthru
      _
    %v18 = vld [vmem:[%s0] sm:$0xff]
    %v19 = vld [vmem:[%s0 + $0x8] sm:$0xff]
    %v20 = vld [vmem:[%s1] sm:$0xff]
    %v21 = vld [vmem:[%s1 + $0x8] sm:$0xff]
    %v22 = vld [vmem:[%s1 + $0x10] sm:$0xff]
    %v23 = vld [vmem:[%s1 + $0x18] sm:$0xff]
    %v24 = vld [vmem:[%s1 + $0x20] sm:$0xff]
    %v25 = vld [vmem:[%s1 + $0x28] sm:$0xff]
    %v26 = vld [vmem:[%s1 + $0x30] sm:$0xff]
    %v27 = vld [vmem:[%s1 + $0x38] sm:$0xff]
    %vm28 = vcmask 261120
    %v30 = vsel %vm28, %v18, 0
    %v33 = vsel %vm28, %v19, 0
    %35 = vmatprep.subr.mxu0 0.0
    %36 = vmatpush1.msra.mxu0 0.0
    %37 = vmatprep.subr.mxu0 0.0
    %38 = vmatpush1.msra.mxu0 0.0
    %39 = vmatprep.subr.mxu0 0.0
    %40 = vmatpush1.msra.mxu0 0.0
    %41 = vmatprep.subr.mxu0 0.0
    %42 = vmatpush1.msra.mxu0 0.0
    %43 = vmatprep.subr.mxu0 0.0
    %44 = vmatpush1.msra.mxu0 0.0
    %45 = vmatprep.subr.mxu0 0.0
    %46 = vmatpush1.msra.mxu0 0.0
    %47 = vmatprep.subr.mxu0 0.0
    %48 = vmatpush1.msra.mxu0 0.0
    %49 = vmatprep.subr.mxu0 0.0
    %50 = vmatpush1.msra.mxu0 0.0
    %51 = vmatprep.subr.mxu0 0.0
    %52 = vmatpush1.msra.mxu0 0.0
    %53 = vmatprep.subr.mxu0 0.0
    %54 = vmatpush1.msra.mxu0 0.0
    %55 = vmatprep.subr.mxu0 0.0
    %56 = vmatpush1.msra.mxu0 0.0
    %57 = vmatprep.subr.mxu0 0.0
    %58 = vmatpush1.msra.mxu0 0.0
    %59 = vmatprep.subr.mxu0 %v27
    %60 = vmatpush1.msra.mxu0 %v26
    %61 = vmatprep.subr.mxu0 %v25
    %62 = vmatpush1.msra.mxu0 %v24
    %63 = vmatprep.subr.mxu0 %v23
    %64 = vmatpush1.msra.mxu0 %v22
    %65 = vmatprep.subr.mxu0 %v21
    %66 = vmatpush1.msra.mxu0 %v20
    %67 = vmatprep.subr.mxu0 0.0
    %68 = vmatpush2.msra.mxu0 0.0
    %69 = vmatprep.subr.mxu0 0.0
    %70 = vmatpush2.msra.mxu0 0.0
    %71 = vmatprep.subr.mxu0 0.0
    %72 = vmatpush2.msra.mxu0 0.0
    %73 = vmatprep.subr.mxu0 0.0
    %74 = vmatpush2.msra.mxu0 0.0
    %75 = vmatprep.subr.mxu0 0.0
    %76 = vmatpush2.msra.mxu0 0.0
    %77 = vmatprep.subr.mxu0 0.0
    %78 = vmatpush2.msra.mxu0 0.0
    %79 = vmatprep.subr.mxu0 0.0
    %80 = vmatpush2.msra.mxu0 0.0
    %81 = vmatprep.subr.mxu0 0.0
    %82 = vmatpush2.msra.mxu0 0.0
    %83 = vmatprep.subr.mxu0 0.0
    %84 = vmatpush2.msra.mxu0 0.0
    %85 = vmatprep.subr.mxu0 0.0
    %86 = vmatpush2.msra.mxu0 0.0
    %87 = vmatprep.subr.mxu0 0.0
    %88 = vmatpush2.msra.mxu0 0.0
    %89 = vmatprep.subr.mxu0 0.0
    %90 = vmatpush2.msra.mxu0 0.0
    %91 = vmatprep.subr.mxu0 0.0
    %92 = vmatpush2.msra.mxu0 0.0
    %93 = vmatprep.subr.mxu0 0.0
    %94 = vmatpush2.msra.mxu0 0.0
    %95 = vmatprep.subr.mxu0 0.0
    %96 = vmatpush2.msra.mxu0 0.0
    %97 = vmatprep.subr.mxu0 0.0
    %98 = vmatpush2.msra.mxu0 0.0
    %99 = vmatprep.mubr.f32.mxu0 0.0
    %100 = vmatmul.mubr.f32.gmra.mxu0 %v30
    %v101 = vpop.f32.mrf.mxu0
    %v102 = vadd.f32 0.0, %v101
    %v103 = vpop.f32.mrf.mxu0
    %v104 = vadd.f32 0.0, %v103
    %105 = vmatprep.mubr.f32.mxu0 0.0
    %106 = vmatmul.mubr.f32.gmra.mxu0 %v33
    %v107 = vpop.f32.mrf.mxu0
    %v108 = vadd.f32 0.0, %v107
    %v109 = vpop.f32.mrf.mxu0
    %v110 = vadd.f32 0.0, %v109
    %111 = vdwg.mxu0
    %v112 = vld [vmem:[%s3] sm:$0x7]
    %v114 = vsel %vm28, %v102, 0
    %116 = vmatprep.subr.mxu0 0.0
    %117 = vmatpush1.xpose.msra.mxu0 0.0
    %118 = vmatprep.subr.mxu0 0.0
    %119 = vmatpush1.xpose.msra.mxu0 0.0
    %120 = vmatprep.subr.mxu0 0.0
    %121 = vmatpush1.xpose.msra.mxu0 0.0
    %122 = vmatprep.subr.mxu0 0.0
    %123 = vmatpush1.xpose.msra.mxu0 0.0
    %124 = vmatprep.subr.mxu0 0.0
    %125 = vmatpush1.xpose.msra.mxu0 0.0
    %126 = vmatprep.subr.mxu0 0.0
    %127 = vmatpush1.xpose.msra.mxu0 0.0
    %128 = vmatprep.subr.mxu0 0.0
    %129 = vmatpush1.xpose.msra.mxu0 0.0
    %130 = vmatprep.subr.mxu0 0.0
    %131 = vmatpush1.xpose.msra.mxu0 0.0
    %132 = vmatprep.subr.mxu0 0.0
    %133 = vmatpush1.xpose.msra.mxu0 0.0
    %134 = vmatprep.subr.mxu0 0.0
    %135 = vmatpush1.xpose.msra.mxu0 0.0
    %136 = vmatprep.subr.mxu0 0.0
    %137 = vmatpush1.xpose.msra.mxu0 0.0
    %138 = vmatprep.subr.mxu0 0.0
    %139 = vmatpush1.xpose.msra.mxu0 0.0
    %140 = vmatprep.subr.mxu0 0.0
    %141 = vmatpush1.xpose.msra.mxu0 0.0
    %142 = vmatprep.subr.mxu0 0.0
    %143 = vmatpush1.xpose.msra.mxu0 0.0
    %144 = vmatprep.subr.mxu0 0.0
    %145 = vmatpush1.xpose.msra.mxu0 0.0
    %146 = vmatprep.subr.mxu0 0.0
    %147 = vmatpush1.xpose.msra.mxu0 %v30
    %148 = vmatprep.subr.mxu0 0.0
    %149 = vmatpush2.xpose.msra.mxu0 0.0
    %150 = vmatprep.subr.mxu0 0.0
    %151 = vmatpush2.xpose.msra.mxu0 0.0
    %152 = vmatprep.subr.mxu0 0.0
    %153 = vmatpush2.xpose.msra.mxu0 0.0
    %154 = vmatprep.subr.mxu0 0.0
    %155 = vmatpush2.xpose.msra.mxu0 0.0
    %156 = vmatprep.subr.mxu0 0.0
    %157 = vmatpush2.xpose.msra.mxu0 0.0
    %158 = vmatprep.subr.mxu0 0.0
    %159 = vmatpush2.xpose.msra.mxu0 0.0
    %160 = vmatprep.subr.mxu0 0.0
    %161 = vmatpush2.xpose.msra.mxu0 0.0
    %162 = vmatprep.subr.mxu0 0.0
    %163 = vmatpush2.xpose.msra.mxu0 0.0
    %164 = vmatprep.subr.mxu0 0.0
    %165 = vmatpush2.xpose.msra.mxu0 0.0
    %166 = vmatprep.subr.mxu0 0.0
    %167 = vmatpush2.xpose.msra.mxu0 0.0
    %168 = vmatprep.subr.mxu0 0.0
    %169 = vmatpush2.xpose.msra.mxu0 0.0
    %170 = vmatprep.subr.mxu0 0.0
    %171 = vmatpush2.xpose.msra.mxu0 0.0
    %172 = vmatprep.subr.mxu0 0.0
    %173 = vmatpush2.xpose.msra.mxu0 0.0
    %174 = vmatprep.subr.mxu0 0.0
    %175 = vmatpush2.xpose.msra.mxu0 0.0
    %176 = vmatprep.subr.mxu0 0.0
    %177 = vmatpush2.xpose.msra.mxu0 0.0
    %178 = vmatprep.subr.mxu0 0.0
    %179 = vmatpush2.xpose.msra.mxu0 0.0
    %180 = vmatprep.mubr.f32.mxu0 0.0
    %181 = vmatmul.mubr.f32.gmra.mxu0 %v114
    %v182 = vpop.f32.mrf.mxu0
    %v183 = vadd.f32 0.0, %v182
    %v184 = vpop.f32.mrf.mxu0
    %185 = vdwg.mxu0
    %vm186 = vcmask 64512
    %v187 = vsel %vm186, %v183, -inf
    %188 = vmax.xlane.f32.xlu0 %v187
    %v189 = vpop.xlane.xlu0 %188
    %v190 = vsub.f32 %v183, %v189
    %v191 = vmul.f32 %v190, 1.442695
    %v192 = vpow.pop %v191
    %v193 = vsel %vm186, %v192, 0.0
    %194 = vadd.xlane.f32.xlu0 %v193
    %v195 = vpop.xlane.xlu0 %194
    %v196 = vrcp.pop %v195
    %v197 = vmul.f32 %v192, %v196
    %v199 = vsel %vm186, %v197, 0
    %201 = vmatprep.subr.mxu0 0.0
    %202 = vmatpush1.msra.mxu0 0.0
    %203 = vmatprep.subr.mxu0 0.0
    %204 = vmatpush1.msra.mxu0 0.0
    %205 = vmatprep.subr.mxu0 0.0
    %206 = vmatpush1.msra.mxu0 0.0
    %207 = vmatprep.subr.mxu0 0.0
    %208 = vmatpush1.msra.mxu0 0.0
    %209 = vmatprep.subr.mxu0 0.0
    %210 = vmatpush1.msra.mxu0 0.0
    %211 = vmatprep.subr.mxu0 0.0
    %212 = vmatpush1.msra.mxu0 0.0
    %213 = vmatprep.subr.mxu0 0.0
    %214 = vmatpush1.msra.mxu0 0.0
    %215 = vmatprep.subr.mxu0 0.0
    %216 = vmatpush1.msra.mxu0 0.0
    %217 = vmatprep.subr.mxu0 0.0
    %218 = vmatpush1.msra.mxu0 0.0
    %219 = vmatprep.subr.mxu0 0.0
    %220 = vmatpush1.msra.mxu0 0.0
    %221 = vmatprep.subr.mxu0 0.0
    %222 = vmatpush1.msra.mxu0 0.0
    %223 = vmatprep.subr.mxu0 0.0
    %224 = vmatpush1.msra.mxu0 0.0
    %225 = vmatprep.subr.mxu0 0.0
    %226 = vmatpush1.msra.mxu0 0.0
    %227 = vmatprep.subr.mxu0 0.0
    %228 = vmatpush1.msra.mxu0 0.0
    %229 = vmatprep.subr.mxu0 0.0
    %230 = vmatpush1.msra.mxu0 0.0
    %231 = vmatprep.subr.mxu0 0.0
    %232 = vmatpush1.msra.mxu0 %v104
    %233 = vmatprep.subr.mxu0 0.0
    %234 = vmatpush2.msra.mxu0 0.0
    %235 = vmatprep.subr.mxu0 0.0
    %236 = vmatpush2.msra.mxu0 0.0
    %237 = vmatprep.subr.mxu0 0.0
    %238 = vmatpush2.msra.mxu0 0.0
    %239 = vmatprep.subr.mxu0 0.0
    %240 = vmatpush2.msra.mxu0 0.0
    %241 = vmatprep.subr.mxu0 0.0
    %242 = vmatpush2.msra.mxu0 0.0
    %243 = vmatprep.subr.mxu0 0.0
    %244 = vmatpush2.msra.mxu0 0.0
    %245 = vmatprep.subr.mxu0 0.0
    %246 = vmatpush2.msra.mxu0 0.0
    %247 = vmatprep.subr.mxu0 0.0
    %248 = vmatpush2.msra.mxu0 0.0
    %249 = vmatprep.subr.mxu0 0.0
    %250 = vmatpush2.msra.mxu0 0.0
    %251 = vmatprep.subr.mxu0 0.0
    %252 = vmatpush2.msra.mxu0 0.0
    %253 = vmatprep.subr.mxu0 0.0
    %254 = vmatpush2.msra.mxu0 0.0
    %255 = vmatprep.subr.mxu0 0.0
    %256 = vmatpush2.msra.mxu0 0.0
    %257 = vmatprep.subr.mxu0 0.0
    %258 = vmatpush2.msra.mxu0 0.0
    %259 = vmatprep.subr.mxu0 0.0
    %260 = vmatpush2.msra.mxu0 0.0
    %261 = vmatprep.subr.mxu0 0.0
    %262 = vmatpush2.msra.mxu0 0.0
    %263 = vmatprep.subr.mxu0 0.0
    %264 = vmatpush2.msra.mxu0 0.0
    %265 = vmatprep.mubr.f32.mxu0 0.0
    %266 = vmatmul.mubr.f32.gmra.mxu0 %v199
    %v267 = vpop.f32.mrf.mxu0
    %v268 = vadd.f32 0.0, %v267
    %v269 = vpop.f32.mrf.mxu0
    %270 = vdwg.mxu0
    %v271 = vld [vmem:[%s2] sm:$0xff]
    %v272 = vld [vmem:[%s2 + $0x8] sm:$0xf]
    %273 = vrot.lane.b32.xlu0 %v102, 96
    %v274 = vpop.permute.xlu0 %273
    %v275 = vsel %vm28, %v274, 0
    %277 = vmatprep.subr.mxu0 0.0
    %278 = vmatpush1.xpose.msra.mxu0 0.0
    %279 = vmatprep.subr.mxu0 0.0
    %280 = vmatpush1.xpose.msra.mxu0 0.0
    %281 = vmatprep.subr.mxu0 0.0
    %282 = vmatpush1.xpose.msra.mxu0 0.0
    %283 = vmatprep.subr.mxu0 0.0
    %284 = vmatpush1.xpose.msra.mxu0 0.0
    %285 = vmatprep.subr.mxu0 0.0
    %286 = vmatpush1.xpose.msra.mxu0 0.0
    %287 = vmatprep.subr.mxu0 0.0
    %288 = vmatpush1.xpose.msra.mxu0 0.0
    %289 = vmatprep.subr.mxu0 0.0
    %290 = vmatpush1.xpose.msra.mxu0 0.0
    %291 = vmatprep.subr.mxu0 0.0
    %292 = vmatpush1.xpose.msra.mxu0 0.0
    %293 = vmatprep.subr.mxu0 0.0
    %294 = vmatpush1.xpose.msra.mxu0 0.0
    %295 = vmatprep.subr.mxu0 0.0
    %296 = vmatpush1.xpose.msra.mxu0 0.0
    %297 = vmatprep.subr.mxu0 0.0
    %298 = vmatpush1.xpose.msra.mxu0 0.0
    %299 = vmatprep.subr.mxu0 0.0
    %300 = vmatpush1.xpose.msra.mxu0 0.0
    %301 = vmatprep.subr.mxu0 0.0
    %302 = vmatpush1.xpose.msra.mxu0 0.0
    %303 = vmatprep.subr.mxu0 0.0
    %304 = vmatpush1.xpose.msra.mxu0 0.0
    %305 = vmatprep.subr.mxu0 0.0
    %306 = vmatpush1.xpose.msra.mxu0 0.0
    %307 = vmatprep.subr.mxu0 0.0
    %308 = vmatpush1.xpose.msra.mxu0 %v30
    %309 = vmatprep.subr.mxu0 0.0
    %310 = vmatpush2.xpose.msra.mxu0 0.0
    %311 = vmatprep.subr.mxu0 0.0
    %312 = vmatpush2.xpose.msra.mxu0 0.0
    %313 = vmatprep.subr.mxu0 0.0
    %314 = vmatpush2.xpose.msra.mxu0 0.0
    %315 = vmatprep.subr.mxu0 0.0
    %316 = vmatpush2.xpose.msra.mxu0 0.0
    %317 = vmatprep.subr.mxu0 0.0
    %318 = vmatpush2.xpose.msra.mxu0 0.0
    %319 = vmatprep.subr.mxu0 0.0
    %320 = vmatpush2.xpose.msra.mxu0 0.0
    %321 = vmatprep.subr.mxu0 0.0
    %322 = vmatpush2.xpose.msra.mxu0 0.0
    %323 = vmatprep.subr.mxu0 0.0
    %324 = vmatpush2.xpose.msra.mxu0 0.0
    %325 = vmatprep.subr.mxu0 0.0
    %326 = vmatpush2.xpose.msra.mxu0 0.0
    %327 = vmatprep.subr.mxu0 0.0
    %328 = vmatpush2.xpose.msra.mxu0 0.0
    %329 = vmatprep.subr.mxu0 0.0
    %330 = vmatpush2.xpose.msra.mxu0 0.0
    %331 = vmatprep.subr.mxu0 0.0
    %332 = vmatpush2.xpose.msra.mxu0 0.0
    %333 = vmatprep.subr.mxu0 0.0
    %334 = vmatpush2.xpose.msra.mxu0 0.0
    %335 = vmatprep.subr.mxu0 0.0
    %336 = vmatpush2.xpose.msra.mxu0 0.0
    %337 = vmatprep.subr.mxu0 0.0
    %338 = vmatpush2.xpose.msra.mxu0 0.0
    %339 = vmatprep.subr.mxu0 0.0
    %340 = vmatpush2.xpose.msra.mxu0 0.0
    %341 = vmatprep.mubr.f32.mxu0 0.0
    %342 = vmatmul.mubr.f32.gmra.mxu0 %v275
    %v343 = vpop.f32.mrf.mxu0
    %v344 = vadd.f32 0.0, %v343
    %v345 = vpop.f32.mrf.mxu0
    %346 = vdwg.mxu0
    %v347 = vsel %vm186, %v344, -inf
    %348 = vmax.xlane.f32.xlu0 %v347
    %v349 = vpop.xlane.xlu0 %348
    %v350 = vsub.f32 %v344, %v349
    %v351 = vmul.f32 %v350, 1.442695
    %v352 = vpow.pop %v351
    %v353 = vsel %vm186, %v352, 0.0
    %354 = vadd.xlane.f32.xlu0 %v353
    %v355 = vpop.xlane.xlu0 %354
    %v356 = vrcp.pop %v355
    %v357 = vmul.f32 %v352, %v356
    %359 = vrot.lane.b32.xlu0 %v104, 116
    %v360 = vpop.permute.xlu0 %359
    %v363 = vsel %vm186, %v357, 0
    %365 = vmatprep.subr.mxu0 0.0
    %366 = vmatpush1.msra.mxu0 0.0
    %367 = vmatprep.subr.mxu0 0.0
    %368 = vmatpush1.msra.mxu0 0.0
    %369 = vmatprep.subr.mxu0 0.0
    %370 = vmatpush1.msra.mxu0 0.0
    %371 = vmatprep.subr.mxu0 0.0
    %372 = vmatpush1.msra.mxu0 0.0
    %373 = vmatprep.subr.mxu0 0.0
    %374 = vmatpush1.msra.mxu0 0.0
    %375 = vmatprep.subr.mxu0 0.0
    %376 = vmatpush1.msra.mxu0 0.0
    %377 = vmatprep.subr.mxu0 0.0
    %378 = vmatpush1.msra.mxu0 0.0
    %379 = vmatprep.subr.mxu0 0.0
    %380 = vmatpush1.msra.mxu0 0.0
    %381 = vmatprep.subr.mxu0 0.0
    %382 = vmatpush1.msra.mxu0 0.0
    %383 = vmatprep.subr.mxu0 0.0
    %384 = vmatpush1.msra.mxu0 0.0
    %385 = vmatprep.subr.mxu0 0.0
    %386 = vmatpush1.msra.mxu0 0.0
    %387 = vmatprep.subr.mxu0 0.0
    %388 = vmatpush1.msra.mxu0 0.0
    %389 = vmatprep.subr.mxu0 0.0
    %390 = vmatpush1.msra.mxu0 0.0
    %391 = vmatprep.subr.mxu0 0.0
    %392 = vmatpush1.msra.mxu0 0.0
    %393 = vmatprep.subr.mxu0 0.0
    %394 = vmatpush1.msra.mxu0 0.0
    %395 = vmatprep.subr.mxu0 0.0
    %396 = vmatpush1.msra.mxu0 %v360
    %397 = vmatprep.subr.mxu0 0.0
    %398 = vmatpush2.msra.mxu0 0.0
    %399 = vmatprep.subr.mxu0 0.0
    %400 = vmatpush2.msra.mxu0 0.0
    %401 = vmatprep.subr.mxu0 0.0
    %402 = vmatpush2.msra.mxu0 0.0
    %403 = vmatprep.subr.mxu0 0.0
    %404 = vmatpush2.msra.mxu0 0.0
    %405 = vmatprep.subr.mxu0 0.0
    %406 = vmatpush2.msra.mxu0 0.0
    %407 = vmatprep.subr.mxu0 0.0
    %408 = vmatpush2.msra.mxu0 0.0
    %409 = vmatprep.subr.mxu0 0.0
    %410 = vmatpush2.msra.mxu0 0.0
    %411 = vmatprep.subr.mxu0 0.0
    %412 = vmatpush2.msra.mxu0 0.0
    %413 = vmatprep.subr.mxu0 0.0
    %414 = vmatpush2.msra.mxu0 0.0
    %415 = vmatprep.subr.mxu0 0.0
    %416 = vmatpush2.msra.mxu0 0.0
    %417 = vmatprep.subr.mxu0 0.0
    %418 = vmatpush2.msra.mxu0 0.0
    %419 = vmatprep.subr.mxu0 0.0
    %420 = vmatpush2.msra.mxu0 0.0
    %421 = vmatprep.subr.mxu0 0.0
    %422 = vmatpush2.msra.mxu0 0.0
    %423 = vmatprep.subr.mxu0 0.0
    %424 = vmatpush2.msra.mxu0 0.0
    %425 = vmatprep.subr.mxu0 0.0
    %426 = vmatpush2.msra.mxu0 0.0
    %427 = vmatprep.subr.mxu0 0.0
    %428 = vmatpush2.msra.mxu0 0.0
    %429 = vmatprep.mubr.f32.mxu0 0.0
    %430 = vmatmul.mubr.f32.gmra.mxu0 %v363
    %v431 = vpop.f32.mrf.mxu0
    %v432 = vadd.f32 0.0, %v431
    %v433 = vpop.f32.mrf.mxu0
    %434 = vdwg.mxu0
    %s435 = scalar_lea.vmem %s2, 16
    %v436 = vld [vmem:[%s435] sm:$0xff]
    %v437 = vld [vmem:[%s435 + $0x8] sm:$0xf]
    %vm438 = vcmask 97280
    %v440 = vsel %vm438, %v432, 0
    %vm442 = vcmask 1043456
    %v444 = vsel %vm442, %v437, 0
    %446 = vmatprep.subr.mxu0 0.0
    %447 = vmatpush1.msra.mxu0 0.0
    %448 = vmatprep.subr.mxu0 0.0
    %449 = vmatpush1.msra.mxu0 0.0
    %450 = vmatprep.subr.mxu0 0.0
    %451 = vmatpush1.msra.mxu0 0.0
    %452 = vmatprep.subr.mxu0 0.0
    %453 = vmatpush1.msra.mxu0 0.0
    %454 = vmatprep.subr.mxu0 0.0
    %455 = vmatpush1.msra.mxu0 0.0
    %456 = vmatprep.subr.mxu0 0.0
    %457 = vmatpush1.msra.mxu0 0.0
    %458 = vmatprep.subr.mxu0 0.0
    %459 = vmatpush1.msra.mxu0 0.0
    %460 = vmatprep.subr.mxu0 0.0
    %461 = vmatpush1.msra.mxu0 0.0
    %462 = vmatprep.subr.mxu0 0.0
    %463 = vmatpush1.msra.mxu0 0.0
    %464 = vmatprep.subr.mxu0 0.0
    %465 = vmatpush1.msra.mxu0 0.0
    %466 = vmatprep.subr.mxu0 0.0
    %467 = vmatpush1.msra.mxu0 0.0
    %468 = vmatprep.subr.mxu0 0.0
    %469 = vmatpush1.msra.mxu0 0.0
    %470 = vmatprep.subr.mxu0 0.0
    %471 = vmatpush1.msra.mxu0 0.0
    %472 = vmatprep.subr.mxu0 0.0
    %473 = vmatpush1.msra.mxu0 0.0
    %474 = vmatprep.subr.mxu0 0.0
    %475 = vmatpush1.msra.mxu0 %v444
    %476 = vmatprep.subr.mxu0 0.0
    %477 = vmatpush1.msra.mxu0 %v436
    %478 = vmatprep.subr.mxu0 0.0
    %479 = vmatpush2.msra.mxu0 0.0
    %480 = vmatprep.subr.mxu0 0.0
    %481 = vmatpush2.msra.mxu0 0.0
    %482 = vmatprep.subr.mxu0 0.0
    %483 = vmatpush2.msra.mxu0 0.0
    %484 = vmatprep.subr.mxu0 0.0
    %485 = vmatpush2.msra.mxu0 0.0
    %486 = vmatprep.subr.mxu0 0.0
    %487 = vmatpush2.msra.mxu0 0.0
    %488 = vmatprep.subr.mxu0 0.0
    %489 = vmatpush2.msra.mxu0 0.0
    %490 = vmatprep.subr.mxu0 0.0
    %491 = vmatpush2.msra.mxu0 0.0
    %492 = vmatprep.subr.mxu0 0.0
    %493 = vmatpush2.msra.mxu0 0.0
    %494 = vmatprep.subr.mxu0 0.0
    %495 = vmatpush2.msra.mxu0 0.0
    %496 = vmatprep.subr.mxu0 0.0
    %497 = vmatpush2.msra.mxu0 0.0
    %498 = vmatprep.subr.mxu0 0.0
    %499 = vmatpush2.msra.mxu0 0.0
    %500 = vmatprep.subr.mxu0 0.0
    %501 = vmatpush2.msra.mxu0 0.0
    %502 = vmatprep.subr.mxu0 0.0
    %503 = vmatpush2.msra.mxu0 0.0
    %504 = vmatprep.subr.mxu0 0.0
    %505 = vmatpush2.msra.mxu0 0.0
    %506 = vmatprep.subr.mxu0 0.0
    %507 = vmatpush2.msra.mxu0 0.0
    %508 = vmatprep.subr.mxu0 0.0
    %509 = vmatpush2.msra.mxu0 0.0
    %510 = vmatprep.mubr.f32.mxu0 0.0
    %511 = vmatmul.mubr.f32.gmra.mxu0 %v440
    %v512 = vpop.f32.mrf.mxu0
    %v513 = vadd.f32 0.0, %v512
    %v514 = vpop.f32.mrf.mxu0
    %515 = vdwg.mxu0
    %v517 = vsel %vm438, %v268, 0
    %v520 = vsel %vm442, %v272, 0
    %522 = vmatprep.subr.mxu0 0.0
    %523 = vmatpush1.msra.mxu0 0.0
    %524 = vmatprep.subr.mxu0 0.0
    %525 = vmatpush1.msra.mxu0 0.0
    %526 = vmatprep.subr.mxu0 0.0
    %527 = vmatpush1.msra.mxu0 0.0
    %528 = vmatprep.subr.mxu0 0.0
    %529 = vmatpush1.msra.mxu0 0.0
    %530 = vmatprep.subr.mxu0 0.0
    %531 = vmatpush1.msra.mxu0 0.0
    %532 = vmatprep.subr.mxu0 0.0
    %533 = vmatpush1.msra.mxu0 0.0
    %534 = vmatprep.subr.mxu0 0.0
    %535 = vmatpush1.msra.mxu0 0.0
    %536 = vmatprep.subr.mxu0 0.0
    %537 = vmatpush1.msra.mxu0 0.0
    %538 = vmatprep.subr.mxu0 0.0
    %539 = vmatpush1.msra.mxu0 0.0
    %540 = vmatprep.subr.mxu0 0.0
    %541 = vmatpush1.msra.mxu0 0.0
    %542 = vmatprep.subr.mxu0 0.0
    %543 = vmatpush1.msra.mxu0 0.0
    %544 = vmatprep.subr.mxu0 0.0
    %545 = vmatpush1.msra.mxu0 0.0
    %546 = vmatprep.subr.mxu0 0.0
    %547 = vmatpush1.msra.mxu0 0.0
    %548 = vmatprep.subr.mxu0 0.0
    %549 = vmatpush1.msra.mxu0 0.0
    %550 = vmatprep.subr.mxu0 0.0
    %551 = vmatpush1.msra.mxu0 %v520
    %552 = vmatprep.subr.mxu0 0.0
    %553 = vmatpush1.msra.mxu0 %v271
    %554 = vmatprep.subr.mxu0 0.0
    %555 = vmatpush2.msra.mxu0 0.0
    %556 = vmatprep.subr.mxu0 0.0
    %557 = vmatpush2.msra.mxu0 0.0
    %558 = vmatprep.subr.mxu0 0.0
    %559 = vmatpush2.msra.mxu0 0.0
    %560 = vmatprep.subr.mxu0 0.0
    %561 = vmatpush2.msra.mxu0 0.0
    %562 = vmatprep.subr.mxu0 0.0
    %563 = vmatpush2.msra.mxu0 0.0
    %564 = vmatprep.subr.mxu0 0.0
    %565 = vmatpush2.msra.mxu0 0.0
    %566 = vmatprep.subr.mxu0 0.0
    %567 = vmatpush2.msra.mxu0 0.0
    %568 = vmatprep.subr.mxu0 0.0
    %569 = vmatpush2.msra.mxu0 0.0
    %570 = vmatprep.subr.mxu0 0.0
    %571 = vmatpush2.msra.mxu0 0.0
    %572 = vmatprep.subr.mxu0 0.0
    %573 = vmatpush2.msra.mxu0 0.0
    %574 = vmatprep.subr.mxu0 0.0
    %575 = vmatpush2.msra.mxu0 0.0
    %576 = vmatprep.subr.mxu0 0.0
    %577 = vmatpush2.msra.mxu0 0.0
    %578 = vmatprep.subr.mxu0 0.0
    %579 = vmatpush2.msra.mxu0 0.0
    %580 = vmatprep.subr.mxu0 0.0
    %581 = vmatpush2.msra.mxu0 0.0
    %582 = vmatprep.subr.mxu0 0.0
    %583 = vmatpush2.msra.mxu0 0.0
    %584 = vmatprep.subr.mxu0 0.0
    %585 = vmatpush2.msra.mxu0 0.0
    %586 = vmatprep.mubr.f32.mxu0 0.0
    %587 = vmatmul.mubr.f32.gmra.mxu0 %v517
    %v588 = vpop.f32.mrf.mxu0
    %v589 = vadd.f32 %v513, %v588
    %v590 = vpop.f32.mrf.mxu0
    %591 = vdwg.mxu0
    %592 = vrot.lane.b32.xlu0 %v102, 64
    %v593 = vpop.permute.xlu0 %592
    %v594 = vsel %vm28, %v593, 0
    %596 = vmatprep.subr.mxu0 0.0
    %597 = vmatpush1.xpose.msra.mxu0 0.0
    %598 = vmatprep.subr.mxu0 0.0
    %599 = vmatpush1.xpose.msra.mxu0 0.0
    %600 = vmatprep.subr.mxu0 0.0
    %601 = vmatpush1.xpose.msra.mxu0 0.0
    %602 = vmatprep.subr.mxu0 0.0
    %603 = vmatpush1.xpose.msra.mxu0 0.0
    %604 = vmatprep.subr.mxu0 0.0
    %605 = vmatpush1.xpose.msra.mxu0 0.0
    %606 = vmatprep.subr.mxu0 0.0
    %607 = vmatpush1.xpose.msra.mxu0 0.0
    %608 = vmatprep.subr.mxu0 0.0
    %609 = vmatpush1.xpose.msra.mxu0 0.0
    %610 = vmatprep.subr.mxu0 0.0
    %611 = vmatpush1.xpose.msra.mxu0 0.0
    %612 = vmatprep.subr.mxu0 0.0
    %613 = vmatpush1.xpose.msra.mxu0 0.0
    %614 = vmatprep.subr.mxu0 0.0
    %615 = vmatpush1.xpose.msra.mxu0 0.0
    %616 = vmatprep.subr.mxu0 0.0
    %617 = vmatpush1.xpose.msra.mxu0 0.0
    %618 = vmatprep.subr.mxu0 0.0
    %619 = vmatpush1.xpose.msra.mxu0 0.0
    %620 = vmatprep.subr.mxu0 0.0
    %621 = vmatpush1.xpose.msra.mxu0 0.0
    %622 = vmatprep.subr.mxu0 0.0
    %623 = vmatpush1.xpose.msra.mxu0 0.0
    %624 = vmatprep.subr.mxu0 0.0
    %625 = vmatpush1.xpose.msra.mxu0 0.0
    %626 = vmatprep.subr.mxu0 0.0
    %627 = vmatpush1.xpose.msra.mxu0 %v30
    %628 = vmatprep.subr.mxu0 0.0
    %629 = vmatpush2.xpose.msra.mxu0 0.0
    %630 = vmatprep.subr.mxu0 0.0
    %631 = vmatpush2.xpose.msra.mxu0 0.0
    %632 = vmatprep.subr.mxu0 0.0
    %633 = vmatpush2.xpose.msra.mxu0 0.0
    %634 = vmatprep.subr.mxu0 0.0
    %635 = vmatpush2.xpose.msra.mxu0 0.0
    %636 = vmatprep.subr.mxu0 0.0
    %637 = vmatpush2.xpose.msra.mxu0 0.0
    %638 = vmatprep.subr.mxu0 0.0
    %639 = vmatpush2.xpose.msra.mxu0 0.0
    %640 = vmatprep.subr.mxu0 0.0
    %641 = vmatpush2.xpose.msra.mxu0 0.0
    %642 = vmatprep.subr.mxu0 0.0
    %643 = vmatpush2.xpose.msra.mxu0 0.0
    %644 = vmatprep.subr.mxu0 0.0
    %645 = vmatpush2.xpose.msra.mxu0 0.0
    %646 = vmatprep.subr.mxu0 0.0
    %647 = vmatpush2.xpose.msra.mxu0 0.0
    %648 = vmatprep.subr.mxu0 0.0
    %649 = vmatpush2.xpose.msra.mxu0 0.0
    %650 = vmatprep.subr.mxu0 0.0
    %651 = vmatpush2.xpose.msra.mxu0 0.0
    %652 = vmatprep.subr.mxu0 0.0
    %653 = vmatpush2.xpose.msra.mxu0 0.0
    %654 = vmatprep.subr.mxu0 0.0
    %655 = vmatpush2.xpose.msra.mxu0 0.0
    %656 = vmatprep.subr.mxu0 0.0
    %657 = vmatpush2.xpose.msra.mxu0 0.0
    %658 = vmatprep.subr.mxu0 0.0
    %659 = vmatpush2.xpose.msra.mxu0 0.0
    %660 = vmatprep.mubr.f32.mxu0 0.0
    %661 = vmatmul.mubr.f32.gmra.mxu0 %v594
    %v662 = vpop.f32.mrf.mxu0
    %v663 = vadd.f32 0.0, %v662
    %v664 = vpop.f32.mrf.mxu0
    %665 = vdwg.mxu0
    %v666 = vsel %vm186, %v663, -inf
    %667 = vmax.xlane.f32.xlu0 %v666
    %v668 = vpop.xlane.xlu0 %667
    %v669 = vsub.f32 %v663, %v668
    %v670 = vmul.f32 %v669, 1.442695
    %v671 = vpow.pop %v670
    %v672 = vsel %vm186, %v671, 0.0
    %673 = vadd.xlane.f32.xlu0 %v672
    %v674 = vpop.xlane.xlu0 %673
    %v675 = vrcp.pop %v674
    %v676 = vmul.f32 %v671, %v675
    %677 = vrot.lane.b32.xlu0 %v104, 104
    %v678 = vpop.permute.xlu0 %677
    %v681 = vsel %vm186, %v676, 0
    %683 = vmatprep.subr.mxu0 0.0
    %684 = vmatpush1.msra.mxu0 0.0
    %685 = vmatprep.subr.mxu0 0.0
    %686 = vmatpush1.msra.mxu0 0.0
    %687 = vmatprep.subr.mxu0 0.0
    %688 = vmatpush1.msra.mxu0 0.0
    %689 = vmatprep.subr.mxu0 0.0
    %690 = vmatpush1.msra.mxu0 0.0
    %691 = vmatprep.subr.mxu0 0.0
    %692 = vmatpush1.msra.mxu0 0.0
    %693 = vmatprep.subr.mxu0 0.0
    %694 = vmatpush1.msra.mxu0 0.0
    %695 = vmatprep.subr.mxu0 0.0
    %696 = vmatpush1.msra.mxu0 0.0
    %697 = vmatprep.subr.mxu0 0.0
    %698 = vmatpush1.msra.mxu0 0.0
    %699 = vmatprep.subr.mxu0 0.0
    %700 = vmatpush1.msra.mxu0 0.0
    %701 = vmatprep.subr.mxu0 0.0
    %702 = vmatpush1.msra.mxu0 0.0
    %703 = vmatprep.subr.mxu0 0.0
    %704 = vmatpush1.msra.mxu0 0.0
    %705 = vmatprep.subr.mxu0 0.0
    %706 = vmatpush1.msra.mxu0 0.0
    %707 = vmatprep.subr.mxu0 0.0
    %708 = vmatpush1.msra.mxu0 0.0
    %709 = vmatprep.subr.mxu0 0.0
    %710 = vmatpush1.msra.mxu0 0.0
    %711 = vmatprep.subr.mxu0 0.0
    %712 = vmatpush1.msra.mxu0 0.0
    %713 = vmatprep.subr.mxu0 0.0
    %714 = vmatpush1.msra.mxu0 %v678
    %715 = vmatprep.subr.mxu0 0.0
    %716 = vmatpush2.msra.mxu0 0.0
    %717 = vmatprep.subr.mxu0 0.0
    %718 = vmatpush2.msra.mxu0 0.0
    %719 = vmatprep.subr.mxu0 0.0
    %720 = vmatpush2.msra.mxu0 0.0
    %721 = vmatprep.subr.mxu0 0.0
    %722 = vmatpush2.msra.mxu0 0.0
    %723 = vmatprep.subr.mxu0 0.0
    %724 = vmatpush2.msra.mxu0 0.0
    %725 = vmatprep.subr.mxu0 0.0
    %726 = vmatpush2.msra.mxu0 0.0
    %727 = vmatprep.subr.mxu0 0.0
    %728 = vmatpush2.msra.mxu0 0.0
    %729 = vmatprep.subr.mxu0 0.0
    %730 = vmatpush2.msra.mxu0 0.0
    %731 = vmatprep.subr.mxu0 0.0
    %732 = vmatpush2.msra.mxu0 0.0
    %733 = vmatprep.subr.mxu0 0.0
    %734 = vmatpush2.msra.mxu0 0.0
    %735 = vmatprep.subr.mxu0 0.0
    %736 = vmatpush2.msra.mxu0 0.0
    %737 = vmatprep.subr.mxu0 0.0
    %738 = vmatpush2.msra.mxu0 0.0
    %739 = vmatprep.subr.mxu0 0.0
    %740 = vmatpush2.msra.mxu0 0.0
    %741 = vmatprep.subr.mxu0 0.0
    %742 = vmatpush2.msra.mxu0 0.0
    %743 = vmatprep.subr.mxu0 0.0
    %744 = vmatpush2.msra.mxu0 0.0
    %745 = vmatprep.subr.mxu0 0.0
    %746 = vmatpush2.msra.mxu0 0.0
    %747 = vmatprep.mubr.f32.mxu0 0.0
    %748 = vmatmul.mubr.f32.gmra.mxu0 %v681
    %v749 = vpop.f32.mrf.mxu0
    %v750 = vadd.f32 0.0, %v749
    %v751 = vpop.f32.mrf.mxu0
    %752 = vdwg.mxu0
    %s753 = scalar_lea.vmem %s2, 32
    %v754 = vld [vmem:[%s753] sm:$0xff]
    %v755 = vld [vmem:[%s753 + $0x8] sm:$0xf]
    %v757 = vsel %vm438, %v750, 0
    %v760 = vsel %vm442, %v755, 0
    %762 = vmatprep.subr.mxu0 0.0
    %763 = vmatpush1.msra.mxu0 0.0
    %764 = vmatprep.subr.mxu0 0.0
    %765 = vmatpush1.msra.mxu0 0.0
    %766 = vmatprep.subr.mxu0 0.0
    %767 = vmatpush1.msra.mxu0 0.0
    %768 = vmatprep.subr.mxu0 0.0
    %769 = vmatpush1.msra.mxu0 0.0
    %770 = vmatprep.subr.mxu0 0.0
    %771 = vmatpush1.msra.mxu0 0.0
    %772 = vmatprep.subr.mxu0 0.0
    %773 = vmatpush1.msra.mxu0 0.0
    %774 = vmatprep.subr.mxu0 0.0
    %775 = vmatpush1.msra.mxu0 0.0
    %776 = vmatprep.subr.mxu0 0.0
    %777 = vmatpush1.msra.mxu0 0.0
    %778 = vmatprep.subr.mxu0 0.0
    %779 = vmatpush1.msra.mxu0 0.0
    %780 = vmatprep.subr.mxu0 0.0
    %781 = vmatpush1.msra.mxu0 0.0
    %782 = vmatprep.subr.mxu0 0.0
    %783 = vmatpush1.msra.mxu0 0.0
    %784 = vmatprep.subr.mxu0 0.0
    %785 = vmatpush1.msra.mxu0 0.0
    %786 = vmatprep.subr.mxu0 0.0
    %787 = vmatpush1.msra.mxu0 0.0
    %788 = vmatprep.subr.mxu0 0.0
    %789 = vmatpush1.msra.mxu0 0.0
    %790 = vmatprep.subr.mxu0 0.0
    %791 = vmatpush1.msra.mxu0 %v760
    %792 = vmatprep.subr.mxu0 0.0
    %793 = vmatpush1.msra.mxu0 %v754
    %794 = vmatprep.subr.mxu0 0.0
    %795 = vmatpush2.msra.mxu0 0.0
    %796 = vmatprep.subr.mxu0 0.0
    %797 = vmatpush2.msra.mxu0 0.0
    %798 = vmatprep.subr.mxu0 0.0
    %799 = vmatpush2.msra.mxu0 0.0
    %800 = vmatprep.subr.mxu0 0.0
    %801 = vmatpush2.msra.mxu0 0.0
    %802 = vmatprep.subr.mxu0 0.0
    %803 = vmatpush2.msra.mxu0 0.0
    %804 = vmatprep.subr.mxu0 0.0
    %805 = vmatpush2.msra.mxu0 0.0
    %806 = vmatprep.subr.mxu0 0.0
    %807 = vmatpush2.msra.mxu0 0.0
    %808 = vmatprep.subr.mxu0 0.0
    %809 = vmatpush2.msra.mxu0 0.0
    %810 = vmatprep.subr.mxu0 0.0
    %811 = vmatpush2.msra.mxu0 0.0
    %812 = vmatprep.subr.mxu0 0.0
    %813 = vmatpush2.msra.mxu0 0.0
    %814 = vmatprep.subr.mxu0 0.0
    %815 = vmatpush2.msra.mxu0 0.0
    %816 = vmatprep.subr.mxu0 0.0
    %817 = vmatpush2.msra.mxu0 0.0
    %818 = vmatprep.subr.mxu0 0.0
    %819 = vmatpush2.msra.mxu0 0.0
    %820 = vmatprep.subr.mxu0 0.0
    %821 = vmatpush2.msra.mxu0 0.0
    %822 = vmatprep.subr.mxu0 0.0
    %823 = vmatpush2.msra.mxu0 0.0
    %824 = vmatprep.subr.mxu0 0.0
    %825 = vmatpush2.msra.mxu0 0.0
    %826 = vmatprep.mubr.f32.mxu0 0.0
    %827 = vmatmul.mubr.f32.gmra.mxu0 %v757
    %v828 = vpop.f32.mrf.mxu0
    %v829 = vadd.f32 0.0, %v828
    %v830 = vpop.f32.mrf.mxu0
    %831 = vdwg.mxu0
    %v832 = vadd.f32 %v589, %v829
    %833 = vrot.lane.b32.xlu0 %v102, 32
    %v834 = vpop.permute.xlu0 %833
    %v835 = vsel %vm28, %v834, 0
    %837 = vmatprep.subr.mxu0 0.0
    %838 = vmatpush1.xpose.msra.mxu0 0.0
    %839 = vmatprep.subr.mxu0 0.0
    %840 = vmatpush1.xpose.msra.mxu0 0.0
    %841 = vmatprep.subr.mxu0 0.0
    %842 = vmatpush1.xpose.msra.mxu0 0.0
    %843 = vmatprep.subr.mxu0 0.0
    %844 = vmatpush1.xpose.msra.mxu0 0.0
    %845 = vmatprep.subr.mxu0 0.0
    %846 = vmatpush1.xpose.msra.mxu0 0.0
    %847 = vmatprep.subr.mxu0 0.0
    %848 = vmatpush1.xpose.msra.mxu0 0.0
    %849 = vmatprep.subr.mxu0 0.0
    %850 = vmatpush1.xpose.msra.mxu0 0.0
    %851 = vmatprep.subr.mxu0 0.0
    %852 = vmatpush1.xpose.msra.mxu0 0.0
    %853 = vmatprep.subr.mxu0 0.0
    %854 = vmatpush1.xpose.msra.mxu0 0.0
    %855 = vmatprep.subr.mxu0 0.0
    %856 = vmatpush1.xpose.msra.mxu0 0.0
    %857 = vmatprep.subr.mxu0 0.0
    %858 = vmatpush1.xpose.msra.mxu0 0.0
    %859 = vmatprep.subr.mxu0 0.0
    %860 = vmatpush1.xpose.msra.mxu0 0.0
    %861 = vmatprep.subr.mxu0 0.0
    %862 = vmatpush1.xpose.msra.mxu0 0.0
    %863 = vmatprep.subr.mxu0 0.0
    %864 = vmatpush1.xpose.msra.mxu0 0.0
    %865 = vmatprep.subr.mxu0 0.0
    %866 = vmatpush1.xpose.msra.mxu0 0.0
    %867 = vmatprep.subr.mxu0 0.0
    %868 = vmatpush1.xpose.msra.mxu0 %v30
    %869 = vmatprep.subr.mxu0 0.0
    %870 = vmatpush2.xpose.msra.mxu0 0.0
    %871 = vmatprep.subr.mxu0 0.0
    %872 = vmatpush2.xpose.msra.mxu0 0.0
    %873 = vmatprep.subr.mxu0 0.0
    %874 = vmatpush2.xpose.msra.mxu0 0.0
    %875 = vmatprep.subr.mxu0 0.0
    %876 = vmatpush2.xpose.msra.mxu0 0.0
    %877 = vmatprep.subr.mxu0 0.0
    %878 = vmatpush2.xpose.msra.mxu0 0.0
    %879 = vmatprep.subr.mxu0 0.0
    %880 = vmatpush2.xpose.msra.mxu0 0.0
    %881 = vmatprep.subr.mxu0 0.0
    %882 = vmatpush2.xpose.msra.mxu0 0.0
    %883 = vmatprep.subr.mxu0 0.0
    %884 = vmatpush2.xpose.msra.mxu0 0.0
    %885 = vmatprep.subr.mxu0 0.0
    %886 = vmatpush2.xpose.msra.mxu0 0.0
    %887 = vmatprep.subr.mxu0 0.0
    %888 = vmatpush2.xpose.msra.mxu0 0.0
    %889 = vmatprep.subr.mxu0 0.0
    %890 = vmatpush2.xpose.msra.mxu0 0.0
    %891 = vmatprep.subr.mxu0 0.0
    %892 = vmatpush2.xpose.msra.mxu0 0.0
    %893 = vmatprep.subr.mxu0 0.0
    %894 = vmatpush2.xpose.msra.mxu0 0.0
    %895 = vmatprep.subr.mxu0 0.0
    %896 = vmatpush2.xpose.msra.mxu0 0.0
    %897 = vmatprep.subr.mxu0 0.0
    %898 = vmatpush2.xpose.msra.mxu0 0.0
    %899 = vmatprep.subr.mxu0 0.0
    %900 = vmatpush2.xpose.msra.mxu0 0.0
    %901 = vmatprep.mubr.f32.mxu0 0.0
    %902 = vmatmul.mubr.f32.gmra.mxu0 %v835
    %v903 = vpop.f32.mrf.mxu0
    %v904 = vadd.f32 0.0, %v903
    %v905 = vpop.f32.mrf.mxu0
    %906 = vdwg.mxu0
    %v907 = vsel %vm186, %v904, -inf
    %908 = vmax.xlane.f32.xlu0 %v907
    %v909 = vpop.xlane.xlu0 %908
    %v910 = vsub.f32 %v904, %v909
    %v911 = vmul.f32 %v910, 1.442695
    %v912 = vpow.pop %v911
    %v913 = vsel %vm186, %v912, 0.0
    %914 = vadd.xlane.f32.xlu0 %v913
    %v915 = vpop.xlane.xlu0 %914
    %v916 = vrcp.pop %v915
    %v917 = vmul.f32 %v912, %v916
    %918 = vrot.lane.b32.xlu0 %v104, 92
    %v919 = vpop.permute.xlu0 %918
    %v922 = vsel %vm186, %v917, 0
    %924 = vmatprep.subr.mxu0 0.0
    %925 = vmatpush1.msra.mxu0 0.0
    %926 = vmatprep.subr.mxu0 0.0
    %927 = vmatpush1.msra.mxu0 0.0
    %928 = vmatprep.subr.mxu0 0.0
    %929 = vmatpush1.msra.mxu0 0.0
    %930 = vmatprep.subr.mxu0 0.0
    %931 = vmatpush1.msra.mxu0 0.0
    %932 = vmatprep.subr.mxu0 0.0
    %933 = vmatpush1.msra.mxu0 0.0
    %934 = vmatprep.subr.mxu0 0.0
    %935 = vmatpush1.msra.mxu0 0.0
    %936 = vmatprep.subr.mxu0 0.0
    %937 = vmatpush1.msra.mxu0 0.0
    %938 = vmatprep.subr.mxu0 0.0
    %939 = vmatpush1.msra.mxu0 0.0
    %940 = vmatprep.subr.mxu0 0.0
    %941 = vmatpush1.msra.mxu0 0.0
    %942 = vmatprep.subr.mxu0 0.0
    %943 = vmatpush1.msra.mxu0 0.0
    %944 = vmatprep.subr.mxu0 0.0
    %945 = vmatpush1.msra.mxu0 0.0
    %946 = vmatprep.subr.mxu0 0.0
    %947 = vmatpush1.msra.mxu0 0.0
    %948 = vmatprep.subr.mxu0 0.0
    %949 = vmatpush1.msra.mxu0 0.0
    %950 = vmatprep.subr.mxu0 0.0
    %951 = vmatpush1.msra.mxu0 0.0
    %952 = vmatprep.subr.mxu0 0.0
    %953 = vmatpush1.msra.mxu0 0.0
    %954 = vmatprep.subr.mxu0 0.0
    %955 = vmatpush1.msra.mxu0 %v919
    %956 = vmatprep.subr.mxu0 0.0
    %957 = vmatpush2.msra.mxu0 0.0
    %958 = vmatprep.subr.mxu0 0.0
    %959 = vmatpush2.msra.mxu0 0.0
    %960 = vmatprep.subr.mxu0 0.0
    %961 = vmatpush2.msra.mxu0 0.0
    %962 = vmatprep.subr.mxu0 0.0
    %963 = vmatpush2.msra.mxu0 0.0
    %964 = vmatprep.subr.mxu0 0.0
    %965 = vmatpush2.msra.mxu0 0.0
    %966 = vmatprep.subr.mxu0 0.0
    %967 = vmatpush2.msra.mxu0 0.0
    %968 = vmatprep.subr.mxu0 0.0
    %969 = vmatpush2.msra.mxu0 0.0
    %970 = vmatprep.subr.mxu0 0.0
    %971 = vmatpush2.msra.mxu0 0.0
    %972 = vmatprep.subr.mxu0 0.0
    %973 = vmatpush2.msra.mxu0 0.0
    %974 = vmatprep.subr.mxu0 0.0
    %975 = vmatpush2.msra.mxu0 0.0
    %976 = vmatprep.subr.mxu0 0.0
    %977 = vmatpush2.msra.mxu0 0.0
    %978 = vmatprep.subr.mxu0 0.0
    %979 = vmatpush2.msra.mxu0 0.0
    %980 = vmatprep.subr.mxu0 0.0
    %981 = vmatpush2.msra.mxu0 0.0
    %982 = vmatprep.subr.mxu0 0.0
    %983 = vmatpush2.msra.mxu0 0.0
    %984 = vmatprep.subr.mxu0 0.0
    %985 = vmatpush2.msra.mxu0 0.0
    %986 = vmatprep.subr.mxu0 0.0
    %987 = vmatpush2.msra.mxu0 0.0
    %988 = vmatprep.mubr.f32.mxu0 0.0
    %989 = vmatmul.mubr.f32.gmra.mxu0 %v922
    %v990 = vpop.f32.mrf.mxu0
    %v991 = vadd.f32 0.0, %v990
    %v992 = vpop.f32.mrf.mxu0
    %993 = vdwg.mxu0
    %s994 = scalar_lea.vmem %s2, 48
    %v995 = vld [vmem:[%s994] sm:$0xff]
    %v996 = vld [vmem:[%s994 + $0x8] sm:$0xf]
    %v998 = vsel %vm438, %v991, 0
    %v1001 = vsel %vm442, %v996, 0
    %1003 = vmatprep.subr.mxu0 0.0
    %1004 = vmatpush1.msra.mxu0 0.0
    %1005 = vmatprep.subr.mxu0 0.0
    %1006 = vmatpush1.msra.mxu0 0.0
    %1007 = vmatprep.subr.mxu0 0.0
    %1008 = vmatpush1.msra.mxu0 0.0
    %1009 = vmatprep.subr.mxu0 0.0
    %1010 = vmatpush1.msra.mxu0 0.0
    %1011 = vmatprep.subr.mxu0 0.0
    %1012 = vmatpush1.msra.mxu0 0.0
    %1013 = vmatprep.subr.mxu0 0.0
    %1014 = vmatpush1.msra.mxu0 0.0
    %1015 = vmatprep.subr.mxu0 0.0
    %1016 = vmatpush1.msra.mxu0 0.0
    %1017 = vmatprep.subr.mxu0 0.0
    %1018 = vmatpush1.msra.mxu0 0.0
    %1019 = vmatprep.subr.mxu0 0.0
    %1020 = vmatpush1.msra.mxu0 0.0
    %1021 = vmatprep.subr.mxu0 0.0
    %1022 = vmatpush1.msra.mxu0 0.0
    %1023 = vmatprep.subr.mxu0 0.0
    %1024 = vmatpush1.msra.mxu0 0.0
    %1025 = vmatprep.subr.mxu0 0.0
    %1026 = vmatpush1.msra.mxu0 0.0
    %1027 = vmatprep.subr.mxu0 0.0
    %1028 = vmatpush1.msra.mxu0 0.0
    %1029 = vmatprep.subr.mxu0 0.0
    %1030 = vmatpush1.msra.mxu0 0.0
    %1031 = vmatprep.subr.mxu0 0.0
    %1032 = vmatpush1.msra.mxu0 %v1001
    %1033 = vmatprep.subr.mxu0 0.0
    %1034 = vmatpush1.msra.mxu0 %v995
    %1035 = vmatprep.subr.mxu0 0.0
    %1036 = vmatpush2.msra.mxu0 0.0
    %1037 = vmatprep.subr.mxu0 0.0
    %1038 = vmatpush2.msra.mxu0 0.0
    %1039 = vmatprep.subr.mxu0 0.0
    %1040 = vmatpush2.msra.mxu0 0.0
    %1041 = vmatprep.subr.mxu0 0.0
    %1042 = vmatpush2.msra.mxu0 0.0
    %1043 = vmatprep.subr.mxu0 0.0
    %1044 = vmatpush2.msra.mxu0 0.0
    %1045 = vmatprep.subr.mxu0 0.0
    %1046 = vmatpush2.msra.mxu0 0.0
    %1047 = vmatprep.subr.mxu0 0.0
    %1048 = vmatpush2.msra.mxu0 0.0
    %1049 = vmatprep.subr.mxu0 0.0
    %1050 = vmatpush2.msra.mxu0 0.0
    %1051 = vmatprep.subr.mxu0 0.0
    %1052 = vmatpush2.msra.mxu0 0.0
    %1053 = vmatprep.subr.mxu0 0.0
    %1054 = vmatpush2.msra.mxu0 0.0
    %1055 = vmatprep.subr.mxu0 0.0
    %1056 = vmatpush2.msra.mxu0 0.0
    %1057 = vmatprep.subr.mxu0 0.0
    %1058 = vmatpush2.msra.mxu0 0.0
    %1059 = vmatprep.subr.mxu0 0.0
    %1060 = vmatpush2.msra.mxu0 0.0
    %1061 = vmatprep.subr.mxu0 0.0
    %1062 = vmatpush2.msra.mxu0 0.0
    %1063 = vmatprep.subr.mxu0 0.0
    %1064 = vmatpush2.msra.mxu0 0.0
    %1065 = vmatprep.subr.mxu0 0.0
    %1066 = vmatpush2.msra.mxu0 0.0
    %1067 = vmatprep.mubr.f32.mxu0 0.0
    %1068 = vmatmul.mubr.f32.gmra.mxu0 %v998
    %v1069 = vpop.f32.mrf.mxu0
    %v1070 = vadd.f32 0.0, %v1069
    %v1071 = vpop.f32.mrf.mxu0
    %1072 = vdwg.mxu0
    %v1073 = vadd.f32 %v832, %v1070
    %v1074 = vsel %vm28, %v1073, 0.0
    %v1075 = vrot.slane %v1074, 4
    %v1076 = vadd.f32 %v1074, %v1075
    %v1077 = vrot.slane %v1076, 2
    %v1078 = vadd.f32 %v1076, %v1077
    %v1079 = vrot.slane %v1078, 1
    %v1080 = vadd.f32 %v1078, %v1079
    %v1081 = vrcp.pop 8.0
    %v1082 = vmul.f32 %v1080, %v1081
    %v1083 = vadd.f32 %v1082, %v112
    %v1084 = vrot.slane %v18, 7
    %v1086 = vadd.f32 %v1083, %v1084
    %v1088 = vsel %vm28, %v108, 0
    %1090 = vmatprep.subr.mxu0 0.0
    %1091 = vmatpush1.xpose.msra.mxu0 0.0
    %1092 = vmatprep.subr.mxu0 0.0
    %1093 = vmatpush1.xpose.msra.mxu0 0.0
    %1094 = vmatprep.subr.mxu0 0.0
    %1095 = vmatpush1.xpose.msra.mxu0 0.0
    %1096 = vmatprep.subr.mxu0 0.0
    %1097 = vmatpush1.xpose.msra.mxu0 0.0
    %1098 = vmatprep.subr.mxu0 0.0
    %1099 = vmatpush1.xpose.msra.mxu0 0.0
    %1100 = vmatprep.subr.mxu0 0.0
    %1101 = vmatpush1.xpose.msra.mxu0 0.0
    %1102 = vmatprep.subr.mxu0 0.0
    %1103 = vmatpush1.xpose.msra.mxu0 0.0
    %1104 = vmatprep.subr.mxu0 0.0
    %1105 = vmatpush1.xpose.msra.mxu0 0.0
    %1106 = vmatprep.subr.mxu0 0.0
    %1107 = vmatpush1.xpose.msra.mxu0 0.0
    %1108 = vmatprep.subr.mxu0 0.0
    %1109 = vmatpush1.xpose.msra.mxu0 0.0
    %1110 = vmatprep.subr.mxu0 0.0
    %1111 = vmatpush1.xpose.msra.mxu0 0.0
    %1112 = vmatprep.subr.mxu0 0.0
    %1113 = vmatpush1.xpose.msra.mxu0 0.0
    %1114 = vmatprep.subr.mxu0 0.0
    %1115 = vmatpush1.xpose.msra.mxu0 0.0
    %1116 = vmatprep.subr.mxu0 0.0
    %1117 = vmatpush1.xpose.msra.mxu0 0.0
    %1118 = vmatprep.subr.mxu0 0.0
    %1119 = vmatpush1.xpose.msra.mxu0 0.0
    %1120 = vmatprep.subr.mxu0 0.0
    %1121 = vmatpush1.xpose.msra.mxu0 %v33
    %1122 = vmatprep.subr.mxu0 0.0
    %1123 = vmatpush2.xpose.msra.mxu0 0.0
    %1124 = vmatprep.subr.mxu0 0.0
    %1125 = vmatpush2.xpose.msra.mxu0 0.0
    %1126 = vmatprep.subr.mxu0 0.0
    %1127 = vmatpush2.xpose.msra.mxu0 0.0
    %1128 = vmatprep.subr.mxu0 0.0
    %1129 = vmatpush2.xpose.msra.mxu0 0.0
    %1130 = vmatprep.subr.mxu0 0.0
    %1131 = vmatpush2.xpose.msra.mxu0 0.0
    %1132 = vmatprep.subr.mxu0 0.0
    %1133 = vmatpush2.xpose.msra.mxu0 0.0
    %1134 = vmatprep.subr.mxu0 0.0
    %1135 = vmatpush2.xpose.msra.mxu0 0.0
    %1136 = vmatprep.subr.mxu0 0.0
    %1137 = vmatpush2.xpose.msra.mxu0 0.0
    %1138 = vmatprep.subr.mxu0 0.0
    %1139 = vmatpush2.xpose.msra.mxu0 0.0
    %1140 = vmatprep.subr.mxu0 0.0
    %1141 = vmatpush2.xpose.msra.mxu0 0.0
    %1142 = vmatprep.subr.mxu0 0.0
    %1143 = vmatpush2.xpose.msra.mxu0 0.0
    %1144 = vmatprep.subr.mxu0 0.0
    %1145 = vmatpush2.xpose.msra.mxu0 0.0
    %1146 = vmatprep.subr.mxu0 0.0
    %1147 = vmatpush2.xpose.msra.mxu0 0.0
    %1148 = vmatprep.subr.mxu0 0.0
    %1149 = vmatpush2.xpose.msra.mxu0 0.0
    %1150 = vmatprep.subr.mxu0 0.0
    %1151 = vmatpush2.xpose.msra.mxu0 0.0
    %1152 = vmatprep.subr.mxu0 0.0
    %1153 = vmatpush2.xpose.msra.mxu0 0.0
    %1154 = vmatprep.mubr.f32.mxu0 0.0
    %1155 = vmatmul.mubr.f32.gmra.mxu0 %v1088
    %v1156 = vpop.f32.mrf.mxu0
    %v1157 = vadd.f32 0.0, %v1156
    %v1158 = vpop.f32.mrf.mxu0
    %1159 = vdwg.mxu0
    %v1160 = vsel %vm186, %v1157, -inf
    %1161 = vmax.xlane.f32.xlu0 %v1160
    %v1162 = vpop.xlane.xlu0 %1161
    %v1163 = vsub.f32 %v1157, %v1162
    %v1164 = vmul.f32 %v1163, 1.442695
    %v1165 = vpow.pop %v1164
    %v1166 = vsel %vm186, %v1165, 0.0
    %1167 = vadd.xlane.f32.xlu0 %v1166
    %v1168 = vpop.xlane.xlu0 %1167
    %v1169 = vrcp.pop %v1168
    %v1170 = vmul.f32 %v1165, %v1169
    %v1172 = vsel %vm186, %v1170, 0
    %1174 = vmatprep.subr.mxu0 0.0
    %1175 = vmatpush1.msra.mxu0 0.0
    %1176 = vmatprep.subr.mxu0 0.0
    %1177 = vmatpush1.msra.mxu0 0.0
    %1178 = vmatprep.subr.mxu0 0.0
    %1179 = vmatpush1.msra.mxu0 0.0
    %1180 = vmatprep.subr.mxu0 0.0
    %1181 = vmatpush1.msra.mxu0 0.0
    %1182 = vmatprep.subr.mxu0 0.0
    %1183 = vmatpush1.msra.mxu0 0.0
    %1184 = vmatprep.subr.mxu0 0.0
    %1185 = vmatpush1.msra.mxu0 0.0
    %1186 = vmatprep.subr.mxu0 0.0
    %1187 = vmatpush1.msra.mxu0 0.0
    %1188 = vmatprep.subr.mxu0 0.0
    %1189 = vmatpush1.msra.mxu0 0.0
    %1190 = vmatprep.subr.mxu0 0.0
    %1191 = vmatpush1.msra.mxu0 0.0
    %1192 = vmatprep.subr.mxu0 0.0
    %1193 = vmatpush1.msra.mxu0 0.0
    %1194 = vmatprep.subr.mxu0 0.0
    %1195 = vmatpush1.msra.mxu0 0.0
    %1196 = vmatprep.subr.mxu0 0.0
    %1197 = vmatpush1.msra.mxu0 0.0
    %1198 = vmatprep.subr.mxu0 0.0
    %1199 = vmatpush1.msra.mxu0 0.0
    %1200 = vmatprep.subr.mxu0 0.0
    %1201 = vmatpush1.msra.mxu0 0.0
    %1202 = vmatprep.subr.mxu0 0.0
    %1203 = vmatpush1.msra.mxu0 0.0
    %1204 = vmatprep.subr.mxu0 0.0
    %1205 = vmatpush1.msra.mxu0 %v110
    %1206 = vmatprep.subr.mxu0 0.0
    %1207 = vmatpush2.msra.mxu0 0.0
    %1208 = vmatprep.subr.mxu0 0.0
    %1209 = vmatpush2.msra.mxu0 0.0
    %1210 = vmatprep.subr.mxu0 0.0
    %1211 = vmatpush2.msra.mxu0 0.0
    %1212 = vmatprep.subr.mxu0 0.0
    %1213 = vmatpush2.msra.mxu0 0.0
    %1214 = vmatprep.subr.mxu0 0.0
    %1215 = vmatpush2.msra.mxu0 0.0
    %1216 = vmatprep.subr.mxu0 0.0
    %1217 = vmatpush2.msra.mxu0 0.0
    %1218 = vmatprep.subr.mxu0 0.0
    %1219 = vmatpush2.msra.mxu0 0.0
    %1220 = vmatprep.subr.mxu0 0.0
    %1221 = vmatpush2.msra.mxu0 0.0
    %1222 = vmatprep.subr.mxu0 0.0
    %1223 = vmatpush2.msra.mxu0 0.0
    %1224 = vmatprep.subr.mxu0 0.0
    %1225 = vmatpush2.msra.mxu0 0.0
    %1226 = vmatprep.subr.mxu0 0.0
    %1227 = vmatpush2.msra.mxu0 0.0
    %1228 = vmatprep.subr.mxu0 0.0
    %1229 = vmatpush2.msra.mxu0 0.0
    %1230 = vmatprep.subr.mxu0 0.0
    %1231 = vmatpush2.msra.mxu0 0.0
    %1232 = vmatprep.subr.mxu0 0.0
    %1233 = vmatpush2.msra.mxu0 0.0
    %1234 = vmatprep.subr.mxu0 0.0
    %1235 = vmatpush2.msra.mxu0 0.0
    %1236 = vmatprep.subr.mxu0 0.0
    %1237 = vmatpush2.msra.mxu0 0.0
    %1238 = vmatprep.mubr.f32.mxu0 0.0
    %1239 = vmatmul.mubr.f32.gmra.mxu0 %v1172
    %v1240 = vpop.f32.mrf.mxu0
    %v1241 = vadd.f32 0.0, %v1240
    %v1242 = vpop.f32.mrf.mxu0
    %1243 = vdwg.mxu0
    %1244 = vrot.lane.b32.xlu0 %v108, 96
    %v1245 = vpop.permute.xlu0 %1244
    %v1246 = vsel %vm28, %v1245, 0
    %1248 = vmatprep.subr.mxu0 0.0
    %1249 = vmatpush1.xpose.msra.mxu0 0.0
    %1250 = vmatprep.subr.mxu0 0.0
    %1251 = vmatpush1.xpose.msra.mxu0 0.0
    %1252 = vmatprep.subr.mxu0 0.0
    %1253 = vmatpush1.xpose.msra.mxu0 0.0
    %1254 = vmatprep.subr.mxu0 0.0
    %1255 = vmatpush1.xpose.msra.mxu0 0.0
    %1256 = vmatprep.subr.mxu0 0.0
    %1257 = vmatpush1.xpose.msra.mxu0 0.0
    %1258 = vmatprep.subr.mxu0 0.0
    %1259 = vmatpush1.xpose.msra.mxu0 0.0
    %1260 = vmatprep.subr.mxu0 0.0
    %1261 = vmatpush1.xpose.msra.mxu0 0.0
    %1262 = vmatprep.subr.mxu0 0.0
    %1263 = vmatpush1.xpose.msra.mxu0 0.0
    %1264 = vmatprep.subr.mxu0 0.0
    %1265 = vmatpush1.xpose.msra.mxu0 0.0
    %1266 = vmatprep.subr.mxu0 0.0
    %1267 = vmatpush1.xpose.msra.mxu0 0.0
    %1268 = vmatprep.subr.mxu0 0.0
    %1269 = vmatpush1.xpose.msra.mxu0 0.0
    %1270 = vmatprep.subr.mxu0 0.0
    %1271 = vmatpush1.xpose.msra.mxu0 0.0
    %1272 = vmatprep.subr.mxu0 0.0
    %1273 = vmatpush1.xpose.msra.mxu0 0.0
    %1274 = vmatprep.subr.mxu0 0.0
    %1275 = vmatpush1.xpose.msra.mxu0 0.0
    %1276 = vmatprep.subr.mxu0 0.0
    %1277 = vmatpush1.xpose.msra.mxu0 0.0
    %1278 = vmatprep.subr.mxu0 0.0
    %1279 = vmatpush1.xpose.msra.mxu0 %v33
    %1280 = vmatprep.subr.mxu0 0.0
    %1281 = vmatpush2.xpose.msra.mxu0 0.0
    %1282 = vmatprep.subr.mxu0 0.0
    %1283 = vmatpush2.xpose.msra.mxu0 0.0
    %1284 = vmatprep.subr.mxu0 0.0
    %1285 = vmatpush2.xpose.msra.mxu0 0.0
    %1286 = vmatprep.subr.mxu0 0.0
    %1287 = vmatpush2.xpose.msra.mxu0 0.0
    %1288 = vmatprep.subr.mxu0 0.0
    %1289 = vmatpush2.xpose.msra.mxu0 0.0
    %1290 = vmatprep.subr.mxu0 0.0
    %1291 = vmatpush2.xpose.msra.mxu0 0.0
    %1292 = vmatprep.subr.mxu0 0.0
    %1293 = vmatpush2.xpose.msra.mxu0 0.0
    %1294 = vmatprep.subr.mxu0 0.0
    %1295 = vmatpush2.xpose.msra.mxu0 0.0
    %1296 = vmatprep.subr.mxu0 0.0
    %1297 = vmatpush2.xpose.msra.mxu0 0.0
    %1298 = vmatprep.subr.mxu0 0.0
    %1299 = vmatpush2.xpose.msra.mxu0 0.0
    %1300 = vmatprep.subr.mxu0 0.0
    %1301 = vmatpush2.xpose.msra.mxu0 0.0
    %1302 = vmatprep.subr.mxu0 0.0
    %1303 = vmatpush2.xpose.msra.mxu0 0.0
    %1304 = vmatprep.subr.mxu0 0.0
    %1305 = vmatpush2.xpose.msra.mxu0 0.0
    %1306 = vmatprep.subr.mxu0 0.0
    %1307 = vmatpush2.xpose.msra.mxu0 0.0
    %1308 = vmatprep.subr.mxu0 0.0
    %1309 = vmatpush2.xpose.msra.mxu0 0.0
    %1310 = vmatprep.subr.mxu0 0.0
    %1311 = vmatpush2.xpose.msra.mxu0 0.0
    %1312 = vmatprep.mubr.f32.mxu0 0.0
    %1313 = vmatmul.mubr.f32.gmra.mxu0 %v1246
    %v1314 = vpop.f32.mrf.mxu0
    %v1315 = vadd.f32 0.0, %v1314
    %v1316 = vpop.f32.mrf.mxu0
    %1317 = vdwg.mxu0
    %v1318 = vsel %vm186, %v1315, -inf
    %1319 = vmax.xlane.f32.xlu0 %v1318
    %v1320 = vpop.xlane.xlu0 %1319
    %v1321 = vsub.f32 %v1315, %v1320
    %v1322 = vmul.f32 %v1321, 1.442695
    %v1323 = vpow.pop %v1322
    %v1324 = vsel %vm186, %v1323, 0.0
    %1325 = vadd.xlane.f32.xlu0 %v1324
    %v1326 = vpop.xlane.xlu0 %1325
    %v1327 = vrcp.pop %v1326
    %v1328 = vmul.f32 %v1323, %v1327
    %1330 = vrot.lane.b32.xlu0 %v110, 116
    %v1331 = vpop.permute.xlu0 %1330
    %v1334 = vsel %vm186, %v1328, 0
    %1336 = vmatprep.subr.mxu0 0.0
    %1337 = vmatpush1.msra.mxu0 0.0
    %1338 = vmatprep.subr.mxu0 0.0
    %1339 = vmatpush1.msra.mxu0 0.0
    %1340 = vmatprep.subr.mxu0 0.0
    %1341 = vmatpush1.msra.mxu0 0.0
    %1342 = vmatprep.subr.mxu0 0.0
    %1343 = vmatpush1.msra.mxu0 0.0
    %1344 = vmatprep.subr.mxu0 0.0
    %1345 = vmatpush1.msra.mxu0 0.0
    %1346 = vmatprep.subr.mxu0 0.0
    %1347 = vmatpush1.msra.mxu0 0.0
    %1348 = vmatprep.subr.mxu0 0.0
    %1349 = vmatpush1.msra.mxu0 0.0
    %1350 = vmatprep.subr.mxu0 0.0
    %1351 = vmatpush1.msra.mxu0 0.0
    %1352 = vmatprep.subr.mxu0 0.0
    %1353 = vmatpush1.msra.mxu0 0.0
    %1354 = vmatprep.subr.mxu0 0.0
    %1355 = vmatpush1.msra.mxu0 0.0
    %1356 = vmatprep.subr.mxu0 0.0
    %1357 = vmatpush1.msra.mxu0 0.0
    %1358 = vmatprep.subr.mxu0 0.0
    %1359 = vmatpush1.msra.mxu0 0.0
    %1360 = vmatprep.subr.mxu0 0.0
    %1361 = vmatpush1.msra.mxu0 0.0
    %1362 = vmatprep.subr.mxu0 0.0
    %1363 = vmatpush1.msra.mxu0 0.0
    %1364 = vmatprep.subr.mxu0 0.0
    %1365 = vmatpush1.msra.mxu0 0.0
    %1366 = vmatprep.subr.mxu0 0.0
    %1367 = vmatpush1.msra.mxu0 %v1331
    %1368 = vmatprep.subr.mxu0 0.0
    %1369 = vmatpush2.msra.mxu0 0.0
    %1370 = vmatprep.subr.mxu0 0.0
    %1371 = vmatpush2.msra.mxu0 0.0
    %1372 = vmatprep.subr.mxu0 0.0
    %1373 = vmatpush2.msra.mxu0 0.0
    %1374 = vmatprep.subr.mxu0 0.0
    %1375 = vmatpush2.msra.mxu0 0.0
    %1376 = vmatprep.subr.mxu0 0.0
    %1377 = vmatpush2.msra.mxu0 0.0
    %1378 = vmatprep.subr.mxu0 0.0
    %1379 = vmatpush2.msra.mxu0 0.0
    %1380 = vmatprep.subr.mxu0 0.0
    %1381 = vmatpush2.msra.mxu0 0.0
    %1382 = vmatprep.subr.mxu0 0.0
    %1383 = vmatpush2.msra.mxu0 0.0
    %1384 = vmatprep.subr.mxu0 0.0
    %1385 = vmatpush2.msra.mxu0 0.0
    %1386 = vmatprep.subr.mxu0 0.0
    %1387 = vmatpush2.msra.mxu0 0.0
    %1388 = vmatprep.subr.mxu0 0.0
    %1389 = vmatpush2.msra.mxu0 0.0
    %1390 = vmatprep.subr.mxu0 0.0
    %1391 = vmatpush2.msra.mxu0 0.0
    %1392 = vmatprep.subr.mxu0 0.0
    %1393 = vmatpush2.msra.mxu0 0.0
    %1394 = vmatprep.subr.mxu0 0.0
    %1395 = vmatpush2.msra.mxu0 0.0
    %1396 = vmatprep.subr.mxu0 0.0
    %1397 = vmatpush2.msra.mxu0 0.0
    %1398 = vmatprep.subr.mxu0 0.0
    %1399 = vmatpush2.msra.mxu0 0.0
    %1400 = vmatprep.mubr.f32.mxu0 0.0
    %1401 = vmatmul.mubr.f32.gmra.mxu0 %v1334
    %v1402 = vpop.f32.mrf.mxu0
    %v1403 = vadd.f32 0.0, %v1402
    %v1404 = vpop.f32.mrf.mxu0
    %1405 = vdwg.mxu0
    %v1407 = vsel %vm438, %v1403, 0
    %1409 = vmatprep.subr.mxu0 0.0
    %1410 = vmatpush1.msra.mxu0 0.0
    %1411 = vmatprep.subr.mxu0 0.0
    %1412 = vmatpush1.msra.mxu0 0.0
    %1413 = vmatprep.subr.mxu0 0.0
    %1414 = vmatpush1.msra.mxu0 0.0
    %1415 = vmatprep.subr.mxu0 0.0
    %1416 = vmatpush1.msra.mxu0 0.0
    %1417 = vmatprep.subr.mxu0 0.0
    %1418 = vmatpush1.msra.mxu0 0.0
    %1419 = vmatprep.subr.mxu0 0.0
    %1420 = vmatpush1.msra.mxu0 0.0
    %1421 = vmatprep.subr.mxu0 0.0
    %1422 = vmatpush1.msra.mxu0 0.0
    %1423 = vmatprep.subr.mxu0 0.0
    %1424 = vmatpush1.msra.mxu0 0.0
    %1425 = vmatprep.subr.mxu0 0.0
    %1426 = vmatpush1.msra.mxu0 0.0
    %1427 = vmatprep.subr.mxu0 0.0
    %1428 = vmatpush1.msra.mxu0 0.0
    %1429 = vmatprep.subr.mxu0 0.0
    %1430 = vmatpush1.msra.mxu0 0.0
    %1431 = vmatprep.subr.mxu0 0.0
    %1432 = vmatpush1.msra.mxu0 0.0
    %1433 = vmatprep.subr.mxu0 0.0
    %1434 = vmatpush1.msra.mxu0 0.0
    %1435 = vmatprep.subr.mxu0 0.0
    %1436 = vmatpush1.msra.mxu0 0.0
    %1437 = vmatprep.subr.mxu0 0.0
    %1438 = vmatpush1.msra.mxu0 %v444
    %1439 = vmatprep.subr.mxu0 0.0
    %1440 = vmatpush1.msra.mxu0 %v436
    %1441 = vmatprep.subr.mxu0 0.0
    %1442 = vmatpush2.msra.mxu0 0.0
    %1443 = vmatprep.subr.mxu0 0.0
    %1444 = vmatpush2.msra.mxu0 0.0
    %1445 = vmatprep.subr.mxu0 0.0
    %1446 = vmatpush2.msra.mxu0 0.0
    %1447 = vmatprep.subr.mxu0 0.0
    %1448 = vmatpush2.msra.mxu0 0.0
    %1449 = vmatprep.subr.mxu0 0.0
    %1450 = vmatpush2.msra.mxu0 0.0
    %1451 = vmatprep.subr.mxu0 0.0
    %1452 = vmatpush2.msra.mxu0 0.0
    %1453 = vmatprep.subr.mxu0 0.0
    %1454 = vmatpush2.msra.mxu0 0.0
    %1455 = vmatprep.subr.mxu0 0.0
    %1456 = vmatpush2.msra.mxu0 0.0
    %1457 = vmatprep.subr.mxu0 0.0
    %1458 = vmatpush2.msra.mxu0 0.0
    %1459 = vmatprep.subr.mxu0 0.0
    %1460 = vmatpush2.msra.mxu0 0.0
    %1461 = vmatprep.subr.mxu0 0.0
    %1462 = vmatpush2.msra.mxu0 0.0
    %1463 = vmatprep.subr.mxu0 0.0
    %1464 = vmatpush2.msra.mxu0 0.0
    %1465 = vmatprep.subr.mxu0 0.0
    %1466 = vmatpush2.msra.mxu0 0.0
    %1467 = vmatprep.subr.mxu0 0.0
    %1468 = vmatpush2.msra.mxu0 0.0
    %1469 = vmatprep.subr.mxu0 0.0
    %1470 = vmatpush2.msra.mxu0 0.0
    %1471 = vmatprep.subr.mxu0 0.0
    %1472 = vmatpush2.msra.mxu0 0.0
    %1473 = vmatprep.mubr.f32.mxu0 0.0
    %1474 = vmatmul.mubr.f32.gmra.mxu0 %v1407
    %v1475 = vpop.f32.mrf.mxu0
    %v1476 = vadd.f32 0.0, %v1475
    %v1477 = vpop.f32.mrf.mxu0
    %1478 = vdwg.mxu0
    %v1480 = vsel %vm438, %v1241, 0
    %1482 = vmatprep.subr.mxu0 0.0
    %1483 = vmatpush1.msra.mxu0 0.0
    %1484 = vmatprep.subr.mxu0 0.0
    %1485 = vmatpush1.msra.mxu0 0.0
    %1486 = vmatprep.subr.mxu0 0.0
    %1487 = vmatpush1.msra.mxu0 0.0
    %1488 = vmatprep.subr.mxu0 0.0
    %1489 = vmatpush1.msra.mxu0 0.0
    %1490 = vmatprep.subr.mxu0 0.0
    %1491 = vmatpush1.msra.mxu0 0.0
    %1492 = vmatprep.subr.mxu0 0.0
    %1493 = vmatpush1.msra.mxu0 0.0
    %1494 = vmatprep.subr.mxu0 0.0
    %1495 = vmatpush1.msra.mxu0 0.0
    %1496 = vmatprep.subr.mxu0 0.0
    %1497 = vmatpush1.msra.mxu0 0.0
    %1498 = vmatprep.subr.mxu0 0.0
    %1499 = vmatpush1.msra.mxu0 0.0
    %1500 = vmatprep.subr.mxu0 0.0
    %1501 = vmatpush1.msra.mxu0 0.0
    %1502 = vmatprep.subr.mxu0 0.0
    %1503 = vmatpush1.msra.mxu0 0.0
    %1504 = vmatprep.subr.mxu0 0.0
    %1505 = vmatpush1.msra.mxu0 0.0
    %1506 = vmatprep.subr.mxu0 0.0
    %1507 = vmatpush1.msra.mxu0 0.0
    %1508 = vmatprep.subr.mxu0 0.0
    %1509 = vmatpush1.msra.mxu0 0.0
    %1510 = vmatprep.subr.mxu0 0.0
    %1511 = vmatpush1.msra.mxu0 %v520
    %1512 = vmatprep.subr.mxu0 0.0
    %1513 = vmatpush1.msra.mxu0 %v271
    %1514 = vmatprep.subr.mxu0 0.0
    %1515 = vmatpush2.msra.mxu0 0.0
    %1516 = vmatprep.subr.mxu0 0.0
    %1517 = vmatpush2.msra.mxu0 0.0
    %1518 = vmatprep.subr.mxu0 0.0
    %1519 = vmatpush2.msra.mxu0 0.0
    %1520 = vmatprep.subr.mxu0 0.0
    %1521 = vmatpush2.msra.mxu0 0.0
    %1522 = vmatprep.subr.mxu0 0.0
    %1523 = vmatpush2.msra.mxu0 0.0
    %1524 = vmatprep.subr.mxu0 0.0
    %1525 = vmatpush2.msra.mxu0 0.0
    %1526 = vmatprep.subr.mxu0 0.0
    %1527 = vmatpush2.msra.mxu0 0.0
    %1528 = vmatprep.subr.mxu0 0.0
    %1529 = vmatpush2.msra.mxu0 0.0
    %1530 = vmatprep.subr.mxu0 0.0
    %1531 = vmatpush2.msra.mxu0 0.0
    %1532 = vmatprep.subr.mxu0 0.0
    %1533 = vmatpush2.msra.mxu0 0.0
    %1534 = vmatprep.subr.mxu0 0.0
    %1535 = vmatpush2.msra.mxu0 0.0
    %1536 = vmatprep.subr.mxu0 0.0
    %1537 = vmatpush2.msra.mxu0 0.0
    %1538 = vmatprep.subr.mxu0 0.0
    %1539 = vmatpush2.msra.mxu0 0.0
    %1540 = vmatprep.subr.mxu0 0.0
    %1541 = vmatpush2.msra.mxu0 0.0
    %1542 = vmatprep.subr.mxu0 0.0
    %1543 = vmatpush2.msra.mxu0 0.0
    %1544 = vmatprep.subr.mxu0 0.0
    %1545 = vmatpush2.msra.mxu0 0.0
    %1546 = vmatprep.mubr.f32.mxu0 0.0
    %1547 = vmatmul.mubr.f32.gmra.mxu0 %v1480
    %v1548 = vpop.f32.mrf.mxu0
    %v1549 = vadd.f32 %v1476, %v1548
    %v1550 = vpop.f32.mrf.mxu0
    %1551 = vdwg.mxu0
    %1552 = vrot.lane.b32.xlu0 %v108, 64
    %v1553 = vpop.permute.xlu0 %1552
    %v1554 = vsel %vm28, %v1553, 0
    %1556 = vmatprep.subr.mxu0 0.0
    %1557 = vmatpush1.xpose.msra.mxu0 0.0
    %1558 = vmatprep.subr.mxu0 0.0
    %1559 = vmatpush1.xpose.msra.mxu0 0.0
    %1560 = vmatprep.subr.mxu0 0.0
    %1561 = vmatpush1.xpose.msra.mxu0 0.0
    %1562 = vmatprep.subr.mxu0 0.0
    %1563 = vmatpush1.xpose.msra.mxu0 0.0
    %1564 = vmatprep.subr.mxu0 0.0
    %1565 = vmatpush1.xpose.msra.mxu0 0.0
    %1566 = vmatprep.subr.mxu0 0.0
    %1567 = vmatpush1.xpose.msra.mxu0 0.0
    %1568 = vmatprep.subr.mxu0 0.0
    %1569 = vmatpush1.xpose.msra.mxu0 0.0
    %1570 = vmatprep.subr.mxu0 0.0
    %1571 = vmatpush1.xpose.msra.mxu0 0.0
    %1572 = vmatprep.subr.mxu0 0.0
    %1573 = vmatpush1.xpose.msra.mxu0 0.0
    %1574 = vmatprep.subr.mxu0 0.0
    %1575 = vmatpush1.xpose.msra.mxu0 0.0
    %1576 = vmatprep.subr.mxu0 0.0
    %1577 = vmatpush1.xpose.msra.mxu0 0.0
    %1578 = vmatprep.subr.mxu0 0.0
    %1579 = vmatpush1.xpose.msra.mxu0 0.0
    %1580 = vmatprep.subr.mxu0 0.0
    %1581 = vmatpush1.xpose.msra.mxu0 0.0
    %1582 = vmatprep.subr.mxu0 0.0
    %1583 = vmatpush1.xpose.msra.mxu0 0.0
    %1584 = vmatprep.subr.mxu0 0.0
    %1585 = vmatpush1.xpose.msra.mxu0 0.0
    %1586 = vmatprep.subr.mxu0 0.0
    %1587 = vmatpush1.xpose.msra.mxu0 %v33
    %1588 = vmatprep.subr.mxu0 0.0
    %1589 = vmatpush2.xpose.msra.mxu0 0.0
    %1590 = vmatprep.subr.mxu0 0.0
    %1591 = vmatpush2.xpose.msra.mxu0 0.0
    %1592 = vmatprep.subr.mxu0 0.0
    %1593 = vmatpush2.xpose.msra.mxu0 0.0
    %1594 = vmatprep.subr.mxu0 0.0
    %1595 = vmatpush2.xpose.msra.mxu0 0.0
    %1596 = vmatprep.subr.mxu0 0.0
    %1597 = vmatpush2.xpose.msra.mxu0 0.0
    %1598 = vmatprep.subr.mxu0 0.0
    %1599 = vmatpush2.xpose.msra.mxu0 0.0
    %1600 = vmatprep.subr.mxu0 0.0
    %1601 = vmatpush2.xpose.msra.mxu0 0.0
    %1602 = vmatprep.subr.mxu0 0.0
    %1603 = vmatpush2.xpose.msra.mxu0 0.0
    %1604 = vmatprep.subr.mxu0 0.0
    %1605 = vmatpush2.xpose.msra.mxu0 0.0
    %1606 = vmatprep.subr.mxu0 0.0
    %1607 = vmatpush2.xpose.msra.mxu0 0.0
    %1608 = vmatprep.subr.mxu0 0.0
    %1609 = vmatpush2.xpose.msra.mxu0 0.0
    %1610 = vmatprep.subr.mxu0 0.0
    %1611 = vmatpush2.xpose.msra.mxu0 0.0
    %1612 = vmatprep.subr.mxu0 0.0
    %1613 = vmatpush2.xpose.msra.mxu0 0.0
    %1614 = vmatprep.subr.mxu0 0.0
    %1615 = vmatpush2.xpose.msra.mxu0 0.0
    %1616 = vmatprep.subr.mxu0 0.0
    %1617 = vmatpush2.xpose.msra.mxu0 0.0
    %1618 = vmatprep.subr.mxu0 0.0
    %1619 = vmatpush2.xpose.msra.mxu0 0.0
    %1620 = vmatprep.mubr.f32.mxu0 0.0
    %1621 = vmatmul.mubr.f32.gmra.mxu0 %v1554
    %v1622 = vpop.f32.mrf.mxu0
    %v1623 = vadd.f32 0.0, %v1622
    %v1624 = vpop.f32.mrf.mxu0
    %1625 = vdwg.mxu0
    %v1626 = vsel %vm186, %v1623, -inf
    %1627 = vmax.xlane.f32.xlu0 %v1626
    %v1628 = vpop.xlane.xlu0 %1627
    %v1629 = vsub.f32 %v1623, %v1628
    %v1630 = vmul.f32 %v1629, 1.442695
    %v1631 = vpow.pop %v1630
    %v1632 = vsel %vm186, %v1631, 0.0
    %1633 = vadd.xlane.f32.xlu0 %v1632
    %v1634 = vpop.xlane.xlu0 %1633
    %v1635 = vrcp.pop %v1634
    %v1636 = vmul.f32 %v1631, %v1635
    %1637 = vrot.lane.b32.xlu0 %v110, 104
    %v1638 = vpop.permute.xlu0 %1637
    %v1641 = vsel %vm186, %v1636, 0
    %1643 = vmatprep.subr.mxu0 0.0
    %1644 = vmatpush1.msra.mxu0 0.0
    %1645 = vmatprep.subr.mxu0 0.0
    %1646 = vmatpush1.msra.mxu0 0.0
    %1647 = vmatprep.subr.mxu0 0.0
    %1648 = vmatpush1.msra.mxu0 0.0
    %1649 = vmatprep.subr.mxu0 0.0
    %1650 = vmatpush1.msra.mxu0 0.0
    %1651 = vmatprep.subr.mxu0 0.0
    %1652 = vmatpush1.msra.mxu0 0.0
    %1653 = vmatprep.subr.mxu0 0.0
    %1654 = vmatpush1.msra.mxu0 0.0
    %1655 = vmatprep.subr.mxu0 0.0
    %1656 = vmatpush1.msra.mxu0 0.0
    %1657 = vmatprep.subr.mxu0 0.0
    %1658 = vmatpush1.msra.mxu0 0.0
    %1659 = vmatprep.subr.mxu0 0.0
    %1660 = vmatpush1.msra.mxu0 0.0
    %1661 = vmatprep.subr.mxu0 0.0
    %1662 = vmatpush1.msra.mxu0 0.0
    %1663 = vmatprep.subr.mxu0 0.0
    %1664 = vmatpush1.msra.mxu0 0.0
    %1665 = vmatprep.subr.mxu0 0.0
    %1666 = vmatpush1.msra.mxu0 0.0
    %1667 = vmatprep.subr.mxu0 0.0
    %1668 = vmatpush1.msra.mxu0 0.0
    %1669 = vmatprep.subr.mxu0 0.0
    %1670 = vmatpush1.msra.mxu0 0.0
    %1671 = vmatprep.subr.mxu0 0.0
    %1672 = vmatpush1.msra.mxu0 0.0
    %1673 = vmatprep.subr.mxu0 0.0
    %1674 = vmatpush1.msra.mxu0 %v1638
    %1675 = vmatprep.subr.mxu0 0.0
    %1676 = vmatpush2.msra.mxu0 0.0
    %1677 = vmatprep.subr.mxu0 0.0
    %1678 = vmatpush2.msra.mxu0 0.0
    %1679 = vmatprep.subr.mxu0 0.0
    %1680 = vmatpush2.msra.mxu0 0.0
    %1681 = vmatprep.subr.mxu0 0.0
    %1682 = vmatpush2.msra.mxu0 0.0
    %1683 = vmatprep.subr.mxu0 0.0
    %1684 = vmatpush2.msra.mxu0 0.0
    %1685 = vmatprep.subr.mxu0 0.0
    %1686 = vmatpush2.msra.mxu0 0.0
    %1687 = vmatprep.subr.mxu0 0.0
    %1688 = vmatpush2.msra.mxu0 0.0
    %1689 = vmatprep.subr.mxu0 0.0
    %1690 = vmatpush2.msra.mxu0 0.0
    %1691 = vmatprep.subr.mxu0 0.0
    %1692 = vmatpush2.msra.mxu0 0.0
    %1693 = vmatprep.subr.mxu0 0.0
    %1694 = vmatpush2.msra.mxu0 0.0
    %1695 = vmatprep.subr.mxu0 0.0
    %1696 = vmatpush2.msra.mxu0 0.0
    %1697 = vmatprep.subr.mxu0 0.0
    %1698 = vmatpush2.msra.mxu0 0.0
    %1699 = vmatprep.subr.mxu0 0.0
    %1700 = vmatpush2.msra.mxu0 0.0
    %1701 = vmatprep.subr.mxu0 0.0
    %1702 = vmatpush2.msra.mxu0 0.0
    %1703 = vmatprep.subr.mxu0 0.0
    %1704 = vmatpush2.msra.mxu0 0.0
    %1705 = vmatprep.subr.mxu0 0.0
    %1706 = vmatpush2.msra.mxu0 0.0
    %1707 = vmatprep.mubr.f32.mxu0 0.0
    %1708 = vmatmul.mubr.f32.gmra.mxu0 %v1641
    %v1709 = vpop.f32.mrf.mxu0
    %v1710 = vadd.f32 0.0, %v1709
    %v1711 = vpop.f32.mrf.mxu0
    %1712 = vdwg.mxu0
    %v1714 = vsel %vm438, %v1710, 0
    %1716 = vmatprep.subr.mxu0 0.0
    %1717 = vmatpush1.msra.mxu0 0.0
    %1718 = vmatprep.subr.mxu0 0.0
    %1719 = vmatpush1.msra.mxu0 0.0
    %1720 = vmatprep.subr.mxu0 0.0
    %1721 = vmatpush1.msra.mxu0 0.0
    %1722 = vmatprep.subr.mxu0 0.0
    %1723 = vmatpush1.msra.mxu0 0.0
    %1724 = vmatprep.subr.mxu0 0.0
    %1725 = vmatpush1.msra.mxu0 0.0
    %1726 = vmatprep.subr.mxu0 0.0
    %1727 = vmatpush1.msra.mxu0 0.0
    %1728 = vmatprep.subr.mxu0 0.0
    %1729 = vmatpush1.msra.mxu0 0.0
    %1730 = vmatprep.subr.mxu0 0.0
    %1731 = vmatpush1.msra.mxu0 0.0
    %1732 = vmatprep.subr.mxu0 0.0
    %1733 = vmatpush1.msra.mxu0 0.0
    %1734 = vmatprep.subr.mxu0 0.0
    %1735 = vmatpush1.msra.mxu0 0.0
    %1736 = vmatprep.subr.mxu0 0.0
    %1737 = vmatpush1.msra.mxu0 0.0
    %1738 = vmatprep.subr.mxu0 0.0
    %1739 = vmatpush1.msra.mxu0 0.0
    %1740 = vmatprep.subr.mxu0 0.0
    %1741 = vmatpush1.msra.mxu0 0.0
    %1742 = vmatprep.subr.mxu0 0.0
    %1743 = vmatpush1.msra.mxu0 0.0
    %1744 = vmatprep.subr.mxu0 0.0
    %1745 = vmatpush1.msra.mxu0 %v760
    %1746 = vmatprep.subr.mxu0 0.0
    %1747 = vmatpush1.msra.mxu0 %v754
    %1748 = vmatprep.subr.mxu0 0.0
    %1749 = vmatpush2.msra.mxu0 0.0
    %1750 = vmatprep.subr.mxu0 0.0
    %1751 = vmatpush2.msra.mxu0 0.0
    %1752 = vmatprep.subr.mxu0 0.0
    %1753 = vmatpush2.msra.mxu0 0.0
    %1754 = vmatprep.subr.mxu0 0.0
    %1755 = vmatpush2.msra.mxu0 0.0
    %1756 = vmatprep.subr.mxu0 0.0
    %1757 = vmatpush2.msra.mxu0 0.0
    %1758 = vmatprep.subr.mxu0 0.0
    %1759 = vmatpush2.msra.mxu0 0.0
    %1760 = vmatprep.subr.mxu0 0.0
    %1761 = vmatpush2.msra.mxu0 0.0
    %1762 = vmatprep.subr.mxu0 0.0
    %1763 = vmatpush2.msra.mxu0 0.0
    %1764 = vmatprep.subr.mxu0 0.0
    %1765 = vmatpush2.msra.mxu0 0.0
    %1766 = vmatprep.subr.mxu0 0.0
    %1767 = vmatpush2.msra.mxu0 0.0
    %1768 = vmatprep.subr.mxu0 0.0
    %1769 = vmatpush2.msra.mxu0 0.0
    %1770 = vmatprep.subr.mxu0 0.0
    %1771 = vmatpush2.msra.mxu0 0.0
    %1772 = vmatprep.subr.mxu0 0.0
    %1773 = vmatpush2.msra.mxu0 0.0
    %1774 = vmatprep.subr.mxu0 0.0
    %1775 = vmatpush2.msra.mxu0 0.0
    %1776 = vmatprep.subr.mxu0 0.0
    %1777 = vmatpush2.msra.mxu0 0.0
    %1778 = vmatprep.subr.mxu0 0.0
    %1779 = vmatpush2.msra.mxu0 0.0
    %1780 = vmatprep.mubr.f32.mxu0 0.0
    %1781 = vmatmul.mubr.f32.gmra.mxu0 %v1714
    %v1782 = vpop.f32.mrf.mxu0
    %v1783 = vadd.f32 0.0, %v1782
    %v1784 = vpop.f32.mrf.mxu0
    %1785 = vdwg.mxu0
    %v1786 = vadd.f32 %v1549, %v1783
    %1787 = vrot.lane.b32.xlu0 %v108, 32
    %v1788 = vpop.permute.xlu0 %1787
    %v1789 = vsel %vm28, %v1788, 0
    %1791 = vmatprep.subr.mxu0 0.0
    %1792 = vmatpush1.xpose.msra.mxu0 0.0
    %1793 = vmatprep.subr.mxu0 0.0
    %1794 = vmatpush1.xpose.msra.mxu0 0.0
    %1795 = vmatprep.subr.mxu0 0.0
    %1796 = vmatpush1.xpose.msra.mxu0 0.0
    %1797 = vmatprep.subr.mxu0 0.0
    %1798 = vmatpush1.xpose.msra.mxu0 0.0
    %1799 = vmatprep.subr.mxu0 0.0
    %1800 = vmatpush1.xpose.msra.mxu0 0.0
    %1801 = vmatprep.subr.mxu0 0.0
    %1802 = vmatpush1.xpose.msra.mxu0 0.0
    %1803 = vmatprep.subr.mxu0 0.0
    %1804 = vmatpush1.xpose.msra.mxu0 0.0
    %1805 = vmatprep.subr.mxu0 0.0
    %1806 = vmatpush1.xpose.msra.mxu0 0.0
    %1807 = vmatprep.subr.mxu0 0.0
    %1808 = vmatpush1.xpose.msra.mxu0 0.0
    %1809 = vmatprep.subr.mxu0 0.0
    %1810 = vmatpush1.xpose.msra.mxu0 0.0
    %1811 = vmatprep.subr.mxu0 0.0
    %1812 = vmatpush1.xpose.msra.mxu0 0.0
    %1813 = vmatprep.subr.mxu0 0.0
    %1814 = vmatpush1.xpose.msra.mxu0 0.0
    %1815 = vmatprep.subr.mxu0 0.0
    %1816 = vmatpush1.xpose.msra.mxu0 0.0
    %1817 = vmatprep.subr.mxu0 0.0
    %1818 = vmatpush1.xpose.msra.mxu0 0.0
    %1819 = vmatprep.subr.mxu0 0.0
    %1820 = vmatpush1.xpose.msra.mxu0 0.0
    %1821 = vmatprep.subr.mxu0 0.0
    %1822 = vmatpush1.xpose.msra.mxu0 %v33
    %1823 = vmatprep.subr.mxu0 0.0
    %1824 = vmatpush2.xpose.msra.mxu0 0.0
    %1825 = vmatprep.subr.mxu0 0.0
    %1826 = vmatpush2.xpose.msra.mxu0 0.0
    %1827 = vmatprep.subr.mxu0 0.0
    %1828 = vmatpush2.xpose.msra.mxu0 0.0
    %1829 = vmatprep.subr.mxu0 0.0
    %1830 = vmatpush2.xpose.msra.mxu0 0.0
    %1831 = vmatprep.subr.mxu0 0.0
    %1832 = vmatpush2.xpose.msra.mxu0 0.0
    %1833 = vmatprep.subr.mxu0 0.0
    %1834 = vmatpush2.xpose.msra.mxu0 0.0
    %1835 = vmatprep.subr.mxu0 0.0
    %1836 = vmatpush2.xpose.msra.mxu0 0.0
    %1837 = vmatprep.subr.mxu0 0.0
    %1838 = vmatpush2.xpose.msra.mxu0 0.0
    %1839 = vmatprep.subr.mxu0 0.0
    %1840 = vmatpush2.xpose.msra.mxu0 0.0
    %1841 = vmatprep.subr.mxu0 0.0
    %1842 = vmatpush2.xpose.msra.mxu0 0.0
    %1843 = vmatprep.subr.mxu0 0.0
    %1844 = vmatpush2.xpose.msra.mxu0 0.0
    %1845 = vmatprep.subr.mxu0 0.0
    %1846 = vmatpush2.xpose.msra.mxu0 0.0
    %1847 = vmatprep.subr.mxu0 0.0
    %1848 = vmatpush2.xpose.msra.mxu0 0.0
    %1849 = vmatprep.subr.mxu0 0.0
    %1850 = vmatpush2.xpose.msra.mxu0 0.0
    %1851 = vmatprep.subr.mxu0 0.0
    %1852 = vmatpush2.xpose.msra.mxu0 0.0
    %1853 = vmatprep.subr.mxu0 0.0
    %1854 = vmatpush2.xpose.msra.mxu0 0.0
    %1855 = vmatprep.mubr.f32.mxu0 0.0
    %1856 = vmatmul.mubr.f32.gmra.mxu0 %v1789
    %v1857 = vpop.f32.mrf.mxu0
    %v1858 = vadd.f32 0.0, %v1857
    %v1859 = vpop.f32.mrf.mxu0
    %1860 = vdwg.mxu0
    %v1861 = vsel %vm186, %v1858, -inf
    %1862 = vmax.xlane.f32.xlu0 %v1861
    %v1863 = vpop.xlane.xlu0 %1862
    %v1864 = vsub.f32 %v1858, %v1863
    %v1865 = vmul.f32 %v1864, 1.442695
    %v1866 = vpow.pop %v1865
    %v1867 = vsel %vm186, %v1866, 0.0
    %1868 = vadd.xlane.f32.xlu0 %v1867
    %v1869 = vpop.xlane.xlu0 %1868
    %v1870 = vrcp.pop %v1869
    %v1871 = vmul.f32 %v1866, %v1870
    %1872 = vrot.lane.b32.xlu0 %v110, 92
    %v1873 = vpop.permute.xlu0 %1872
    %v1876 = vsel %vm186, %v1871, 0
    %1878 = vmatprep.subr.mxu0 0.0
    %1879 = vmatpush1.msra.mxu0 0.0
    %1880 = vmatprep.subr.mxu0 0.0
    %1881 = vmatpush1.msra.mxu0 0.0
    %1882 = vmatprep.subr.mxu0 0.0
    %1883 = vmatpush1.msra.mxu0 0.0
    %1884 = vmatprep.subr.mxu0 0.0
    %1885 = vmatpush1.msra.mxu0 0.0
    %1886 = vmatprep.subr.mxu0 0.0
    %1887 = vmatpush1.msra.mxu0 0.0
    %1888 = vmatprep.subr.mxu0 0.0
    %1889 = vmatpush1.msra.mxu0 0.0
    %1890 = vmatprep.subr.mxu0 0.0
    %1891 = vmatpush1.msra.mxu0 0.0
    %1892 = vmatprep.subr.mxu0 0.0
    %1893 = vmatpush1.msra.mxu0 0.0
    %1894 = vmatprep.subr.mxu0 0.0
    %1895 = vmatpush1.msra.mxu0 0.0
    %1896 = vmatprep.subr.mxu0 0.0
    %1897 = vmatpush1.msra.mxu0 0.0
    %1898 = vmatprep.subr.mxu0 0.0
    %1899 = vmatpush1.msra.mxu0 0.0
    %1900 = vmatprep.subr.mxu0 0.0
    %1901 = vmatpush1.msra.mxu0 0.0
    %1902 = vmatprep.subr.mxu0 0.0
    %1903 = vmatpush1.msra.mxu0 0.0
    %1904 = vmatprep.subr.mxu0 0.0
    %1905 = vmatpush1.msra.mxu0 0.0
    %1906 = vmatprep.subr.mxu0 0.0
    %1907 = vmatpush1.msra.mxu0 0.0
    %1908 = vmatprep.subr.mxu0 0.0
    %1909 = vmatpush1.msra.mxu0 %v1873
    %1910 = vmatprep.subr.mxu0 0.0
    %1911 = vmatpush2.msra.mxu0 0.0
    %1912 = vmatprep.subr.mxu0 0.0
    %1913 = vmatpush2.msra.mxu0 0.0
    %1914 = vmatprep.subr.mxu0 0.0
    %1915 = vmatpush2.msra.mxu0 0.0
    %1916 = vmatprep.subr.mxu0 0.0
    %1917 = vmatpush2.msra.mxu0 0.0
    %1918 = vmatprep.subr.mxu0 0.0
    %1919 = vmatpush2.msra.mxu0 0.0
    %1920 = vmatprep.subr.mxu0 0.0
    %1921 = vmatpush2.msra.mxu0 0.0
    %1922 = vmatprep.subr.mxu0 0.0
    %1923 = vmatpush2.msra.mxu0 0.0
    %1924 = vmatprep.subr.mxu0 0.0
    %1925 = vmatpush2.msra.mxu0 0.0
    %1926 = vmatprep.subr.mxu0 0.0
    %1927 = vmatpush2.msra.mxu0 0.0
    %1928 = vmatprep.subr.mxu0 0.0
    %1929 = vmatpush2.msra.mxu0 0.0
    %1930 = vmatprep.subr.mxu0 0.0
    %1931 = vmatpush2.msra.mxu0 0.0
    %1932 = vmatprep.subr.mxu0 0.0
    %1933 = vmatpush2.msra.mxu0 0.0
    %1934 = vmatprep.subr.mxu0 0.0
    %1935 = vmatpush2.msra.mxu0 0.0
    %1936 = vmatprep.subr.mxu0 0.0
    %1937 = vmatpush2.msra.mxu0 0.0
    %1938 = vmatprep.subr.mxu0 0.0
    %1939 = vmatpush2.msra.mxu0 0.0
    %1940 = vmatprep.subr.mxu0 0.0
    %1941 = vmatpush2.msra.mxu0 0.0
    %1942 = vmatprep.mubr.f32.mxu0 0.0
    %1943 = vmatmul.mubr.f32.gmra.mxu0 %v1876
    %v1944 = vpop.f32.mrf.mxu0
    %v1945 = vadd.f32 0.0, %v1944
    %v1946 = vpop.f32.mrf.mxu0
    %1947 = vdwg.mxu0
    %v1949 = vsel %vm438, %v1945, 0
    %1951 = vmatprep.subr.mxu0 0.0
    %1952 = vmatpush1.msra.mxu0 0.0
    %1953 = vmatprep.subr.mxu0 0.0
    %1954 = vmatpush1.msra.mxu0 0.0
    %1955 = vmatprep.subr.mxu0 0.0
    %1956 = vmatpush1.msra.mxu0 0.0
    %1957 = vmatprep.subr.mxu0 0.0
    %1958 = vmatpush1.msra.mxu0 0.0
    %1959 = vmatprep.subr.mxu0 0.0
    %1960 = vmatpush1.msra.mxu0 0.0
    %1961 = vmatprep.subr.mxu0 0.0
    %1962 = vmatpush1.msra.mxu0 0.0
    %1963 = vmatprep.subr.mxu0 0.0
    %1964 = vmatpush1.msra.mxu0 0.0
    %1965 = vmatprep.subr.mxu0 0.0
    %1966 = vmatpush1.msra.mxu0 0.0
    %1967 = vmatprep.subr.mxu0 0.0
    %1968 = vmatpush1.msra.mxu0 0.0
    %1969 = vmatprep.subr.mxu0 0.0
    %1970 = vmatpush1.msra.mxu0 0.0
    %1971 = vmatprep.subr.mxu0 0.0
    %1972 = vmatpush1.msra.mxu0 0.0
    %1973 = vmatprep.subr.mxu0 0.0
    %1974 = vmatpush1.msra.mxu0 0.0
    %1975 = vmatprep.subr.mxu0 0.0
    %1976 = vmatpush1.msra.mxu0 0.0
    %1977 = vmatprep.subr.mxu0 0.0
    %1978 = vmatpush1.msra.mxu0 0.0
    %1979 = vmatprep.subr.mxu0 0.0
    %1980 = vmatpush1.msra.mxu0 %v1001
    %1981 = vmatprep.subr.mxu0 0.0
    %1982 = vmatpush1.msra.mxu0 %v995
    %1983 = vmatprep.subr.mxu0 0.0
    %1984 = vmatpush2.msra.mxu0 0.0
    %1985 = vmatprep.subr.mxu0 0.0
    %1986 = vmatpush2.msra.mxu0 0.0
    %1987 = vmatprep.subr.mxu0 0.0
    %1988 = vmatpush2.msra.mxu0 0.0
    %1989 = vmatprep.subr.mxu0 0.0
    %1990 = vmatpush2.msra.mxu0 0.0
    %1991 = vmatprep.subr.mxu0 0.0
    %1992 = vmatpush2.msra.mxu0 0.0
    %1993 = vmatprep.subr.mxu0 0.0
    %1994 = vmatpush2.msra.mxu0 0.0
    %1995 = vmatprep.subr.mxu0 0.0
    %1996 = vmatpush2.msra.mxu0 0.0
    %1997 = vmatprep.subr.mxu0 0.0
    %1998 = vmatpush2.msra.mxu0 0.0
    %1999 = vmatprep.subr.mxu0 0.0
    %2000 = vmatpush2.msra.mxu0 0.0
    %2001 = vmatprep.subr.mxu0 0.0
    %2002 = vmatpush2.msra.mxu0 0.0
    %2003 = vmatprep.subr.mxu0 0.0
    %2004 = vmatpush2.msra.mxu0 0.0
    %2005 = vmatprep.subr.mxu0 0.0
    %2006 = vmatpush2.msra.mxu0 0.0
    %2007 = vmatprep.subr.mxu0 0.0
    %2008 = vmatpush2.msra.mxu0 0.0
    %2009 = vmatprep.subr.mxu0 0.0
    %2010 = vmatpush2.msra.mxu0 0.0
    %2011 = vmatprep.subr.mxu0 0.0
    %2012 = vmatpush2.msra.mxu0 0.0
    %2013 = vmatprep.subr.mxu0 0.0
    %2014 = vmatpush2.msra.mxu0 0.0
    %2015 = vmatprep.mubr.f32.mxu0 0.0
    %2016 = vmatmul.mubr.f32.gmra.mxu0 %v1949
    %v2017 = vpop.f32.mrf.mxu0
    %v2018 = vadd.f32 0.0, %v2017
    %v2019 = vpop.f32.mrf.mxu0
    %2020 = vdwg.mxu0
    %v2021 = vadd.f32 %v1786, %v2018
    %v2022 = vsel %vm28, %v2021, 0.0
    %v2023 = vrot.slane %v2022, 4
    %v2024 = vadd.f32 %v2022, %v2023
    %v2025 = vrot.slane %v2024, 2
    %v2026 = vadd.f32 %v2024, %v2025
    %v2027 = vrot.slane %v2026, 1
    %v2028 = vadd.f32 %v2026, %v2027
    %v2029 = vmul.f32 %v2028, %v1081
    %v2030 = vadd.f32 %v2029, %v112
    %v2031 = vrot.slane %v19, 7
    %v2033 = vadd.f32 %v2030, %v2031
    %v2035 = vrot.slane %v2033, 7
    %vm2037 = vcmask 1040384
    %v2038 = vsel %vm2037, %v1086, %v2035
    %vm2039 = vcmask 254976
    %v2040 = vsel %vm2039, %v2038, 0.0
    %2041 = vadd.xlane.f32.xlu0 %v2040
    %v2042 = vpop.xlane.xlu0 %2041
    %v2043 = vrcp.pop 32.0
    %v2044 = vmul.f32 %v2042, %v2043
    %v2045 = vsub.f32 %v2038, %v2044
    %v2046 = vmul.f32 %v2045, %v2045
    %v2047 = vsel %vm2039, %v2046, 0.0
    %2048 = vadd.xlane.f32.xlu0 %v2047
    %v2049 = vpop.xlane.xlu0 %2048
    %v2050 = vmul.f32 %v2049, %v2043
    %v2051 = vadd.f32 %v2050, 1e-05
    %v2052 = vrsqrt.pop %v2051
    %v2053 = vmul.f32 %v2045, %v2052
    %v2054 = vlaneseq
    %v2055 = vshrl.u32 %v2054, 7
    %v2056 = vsub.s32 1, %v2055
    %v2057 = vrot.slane %v112, %v2056
    %v2058 = vmul.f32 %v2053, %v2057
    %v2059 = vlaneseq
    %v2060 = vshrl.u32 %v2059, 7
    %v2061 = vsub.s32 2, %v2060
    %v2062 = vrot.slane %v112, %v2061
    %v2063 = vadd.f32 %v2058, %v2062
    %2064 = vst.msk [vmem:[#allocation2] sm:$0x3] %vm2039, %v2063
    // Predicated region
    $region18: #{tpu_custom_call.1} parent=1 // pred_check
      _
    $region19: #{tpu_custom_call.1} parent=1 // pred_check_branch
      %2066 = sbr.rel (0) target = $region21
    $region20: #{tpu_custom_call.1} parent=1 // pred_region
      %s2068 = ssub.s32 32, 32
      %2069 = vsyncadd [#allocation3], %s2068
      %s2071 = sshll.u32 [#allocation2], 4
      %s2072 = int_to_ptr.vmem [resolvable:$true] %s2071
      %2074 = dma.vmem_to_hbm [thread:$0]  %s2072, 32, %s4, [#allocation3]
    $region21: #{tpu_custom_call.1} parent=1 // pred_fallthru
      _
    // Predicated region
    $region22: #{tpu_custom_call.1} parent=1 // pred_check
      _
    $region23: #{tpu_custom_call.1} parent=1 // pred_check_branch
      %2076 = sbr.rel (0) target = $region25
    $region24: #{tpu_custom_call.1} parent=1 // pred_region
      %2077 = dma.done [#allocation3], 32
    $region25: #{tpu_custom_call.1} parent=1 // pred_fallthru
      _
    %2078 = vsyncpa [#allocation3], 1

</llo_original>
